<compile_context>
chip_gen: v6e
topology: v6e:2x2x1
jax: 0.10.0
libtpu: 0.0.40
codegen_flags: <defaults>
</compile_context>

<pallas_src>
import jax
import jax.numpy as jnp
from jax.experimental import pallas as pl
from jax.experimental.pallas import tpu as pltpu

NEG_SLOPE = 0.01                          # torch.nn.LeakyReLU default
_VMEM_LIMIT_BYTES = 48 * 1024 * 1024      # raised scoped-VMEM limit (safe v5e/v6e/v7x)
_VMEM_BUDGET_BYTES = 40 * 1024 * 1024     # working-set budget when auto-sizing tiles
_TARGET_BATCH_TILE = 512                  # keep MXU M-depth large (v6e/v7x guidance)


def _leaky_relu(v):
    return jnp.where(v > 0, v, NEG_SLOPE * v)


def _round_up(x, m):
    return (x + m - 1) // m * m


def _pad_axis(a, axis, n):
    """Zero-pad axis `axis` of `a` up to length `n`."""
    if a.shape[axis] == n:
        return a
    pad = [(0, 0)] * a.ndim
    pad[axis] = (0, n - a.shape[axis])
    return jnp.pad(a, pad)


def _pick_batch_tile(batch, per_row_bytes, resident_bytes):
    """Largest multiple-of-8 batch tile that keeps the working set in budget."""
    avail = max(_VMEM_BUDGET_BYTES - resident_bytes, 2 * 1024 * 1024)
    cap = max(avail // max(per_row_bytes, 1), 8)
    tile = min(_TARGET_BATCH_TILE, cap, _round_up(batch, 8))
    return max(8, int(tile) // 8 * 8)


def _make_stacked_mlp_kernel(num_layers, act_last):
    """Fused (Linear -> [LeakyReLU]) x num_layers on one batch tile."""

    def kernel(*refs):
        x_ref = refs[0]
        o_ref = refs[-1]
        h = x_ref[...]
        for l in range(num_layers):
            w_ref = refs[1 + 2 * l]
            b_ref = refs[2 + 2 * l]
            # MXU matmul in the compute dtype (bf16 by default), f32 accumulation.
            h = jnp.dot(h.astype(w_ref.dtype), w_ref[...],
                        preferred_element_type=jnp.float32)
            h = h + b_ref[...]                # bias add in f32
            if l + 1 < num_layers or act_last:
                h = _leaky_relu(h)            # LeakyReLU in f32 (VPU)
        o_ref[...] = h.astype(o_ref.dtype)

    return kernel


def _stacked_mlp_forward(x, weights, biases, *, act_last, out_dtype,
                         compute_dtype, batch_tile, single_buffer_weights):
    """Run M identically-shaped MLPs (stacked weights) over x.

    x: (B, D) shared input, or (M, B, D) per-module input.
    weights[l]: (M, din_l, dout_l);  biases[l]: (M, 1, dout_l) (kept f32).
    Returns (M, B, dout_last) in out_dtype.
    """
    M = weights[0].shape[0]
    shared_x = (x.ndim == 2)
    B = x.shape[0] if shared_x else x.shape[1]
    D = x.shape[-1]
    layer_dims = [(w.shape[1], w.shape[2]) for w in weights]
    out_dim = layer_dims[-1][1]

    in_bytes = jnp.dtype(compute_dtype).itemsize
    out_bytes = jnp.dtype(out_dtype).itemsize

    if batch_tile is None:
        inter_cols = sum(dout for _, dout in layer_dims)
        per_row = (2 * D * in_bytes                 # double-buffered x tile
                   + 2 * out_dim * out_bytes        # double-buffered output tile
                   + 3 * inter_cols * 4)            # f32 intermediates + headroom
        wfac = 1 if single_buffer_weights else 2
        resident = sum(wfac * (din * dout * in_bytes + dout * 4)
                       for din, dout in layer_dims)
        batch_tile = _pick_batch_tile(B, per_row, resident)

    B_pad = _round_up(B, batch_tile)
    if shared_x:
        if B_pad != B:
            x = jnp.pad(x, ((0, B_pad - B), (0, 0)))
        x_spec = pl.BlockSpec((batch_tile, D), lambda m, i: (i, 0))
    else:
        if B_pad != B:
            x = jnp.pad(x, ((0, 0), (0, B_pad - B), (0, 0)))
        x_spec = pl.BlockSpec((None, batch_tile, D), lambda m, i: (m, i, 0))
    x = x.astype(compute_dtype)

    def const_spec(shape):
        # Weights/biases only change with the module index (outer grid axis);
        # single-buffer them to reclaim VMEM (matters most on v7x's 64 MiB).
        kwargs = {}
        if single_buffer_weights:
            kwargs["pipeline_mode"] = pl.Buffered(1)
        return pl.BlockSpec((None,) + shape[1:], lambda m, i: (m, 0, 0), **kwargs)

    in_specs = [x_spec]
    operands = [x]
    for w, b in zip(weights, biases):
        in_specs.append(const_spec(w.shape))
        operands.append(w.astype(compute_dtype))
        in_specs.append(const_spec(b.shape))
        operands.append(b.astype(jnp.float32))    # bias math stays f32

    out_specs = pl.BlockSpec((None, batch_tile, out_dim), lambda m, i: (m, i, 0))
    out_shape = jax.ShapeDtypeStruct((M, B_pad, out_dim), out_dtype)

    flops = 2 * M * B_pad * sum(din * dout for din, dout in layer_dims)
    bytes_accessed = (M * B_pad * D * in_bytes
                      + M * sum(din * dout * in_bytes + dout * 4
                                for din, dout in layer_dims)
                      + M * B_pad * out_dim * out_bytes)
    cost = pl.CostEstimate(flops=int(flops), transcendentals=0,
                           bytes_accessed=int(bytes_accessed))

    grid = (M, B_pad // batch_tile)
    kernel = _make_stacked_mlp_kernel(len(weights), act_last)

    out = pl.pallas_call(
        kernel,
        out_shape=out_shape,
        grid_spec=pltpu.PrefetchScalarGridSpec(
            num_scalar_prefetch=0,
            grid=grid,
            in_specs=in_specs,
            out_specs=out_specs,
        ),
        compiler_params=pltpu.CompilerParams(
            dimension_semantics=("parallel", "parallel"),
            vmem_limit_bytes=_VMEM_LIMIT_BYTES,
        ),
        cost_estimate=cost,
    )(*operands)
    return out[:, :B, :]


def _attention_mix(query, key):
    """cosine-sim -> /batch -> softmax over tasks -> weighted key sum + query."""
    eps = 1e-8
    qn = jnp.maximum(jnp.linalg.norm(query, axis=-1), eps)            # (T, B)
    kn = jnp.maximum(jnp.linalg.norm(key, axis=-1), eps)              # (E, B)
    cos = jnp.einsum("tbh,ebh->teb", query, key) / (qn[:, None, :] * kn[None, :, :])
    alpha = cos.mean(axis=-1) / key.shape[1]                          # (T, E), / batch
    alpha = jax.nn.softmax(alpha, axis=0)                             # softmax over tasks
    attention = jnp.einsum("te,ebh->tbh", alpha, key)
    return query + attention


def _aoe_forward(x, params, *, task_num, expert_num, output_dim,
                 compute_dtype, batch_tile, single_buffer_weights):
    T = task_num
    H = params["qk_w1"].shape[2]
    H_pad = _round_up(H, 128)      # lane-dense query/key store
    O = output_dim
    O_pad = _round_up(O, 128)      # lane-dense tower store (fixes O=4 masked vst)

    # ---- queries & keys: all TaskNets + Experts in ONE stacked-MLP call ----
    qk_w = [params["qk_w1"], params["qk_w2"], _pad_axis(params["qk_w3"], -1, H_pad)]
    qk_b = [params["qk_b1"], params["qk_b2"], _pad_axis(params["qk_b3"], -1, H_pad)]
    qk = _stacked_mlp_forward(
        x, qk_w, qk_b, act_last=True, out_dtype=jnp.float32,
        compute_dtype=compute_dtype, batch_tile=batch_tile,
        single_buffer_weights=single_buffer_weights)                  # (T+E, B, H_pad)
    query, key = qk[:T], qk[T:]

    # ---- attention mixing glue ----
    # TODO(synk): this O(task_num*expert_num) cosine/softmax mixing is left to
    # plain JAX/XLA; fuse it into the tower-kernel input stream if it ever
    # shows up in profiles.
    tower_in = _attention_mix(query, key)                             # (T, B, H_pad)

    # ---- towers: all task towers in ONE stacked-MLP call, padded output ----
    tw_w = [_pad_axis(params["tw_w1"], -2, H_pad), params["tw_w2"],
            params["tw_w3"], _pad_axis(params["tw_w4"], -1, O_pad)]
    tw_b = [params["tw_b1"], params["tw_b2"],
            params["tw_b3"], _pad_axis(params["tw_b4"], -1, O_pad)]
    tower_out = _stacked_mlp_forward(
        tower_in, tw_w, tw_b, act_last=False, out_dtype=jnp.float32,
        compute_dtype=compute_dtype, batch_tile=batch_tile,
        single_buffer_weights=single_buffer_weights)                  # (T, B, O_pad)
    tower_out = tower_out[:, :, :O]
    return [tower_out[t] for t in range(T)]


def aoe_forward(x, params, *, task_num, expert_num, output_dim,
                compute_dtype=jnp.bfloat16, batch_tile=None,
                single_buffer_weights=True):
    """AOE forward. Returns a list of task_num arrays of shape (batch, output_dim)."""
    try:
        out = _aoe_forward(x, params, task_num=task_num, expert_num=expert_num,
                           output_dim=output_dim, compute_dtype=compute_dtype,
                           batch_tile=batch_tile,
                           single_buffer_weights=single_buffer_weights)
        return jax.block_until_ready(out)
    except Exception:
        if not single_buffer_weights:
            raise
        # pl.Buffered(1) single-buffering not supported on this jax build;
        # fall back to default double-buffered weight blocks.
        out = _aoe_forward(x, params, task_num=task_num, expert_num=expert_num,
                           output_dim=output_dim, compute_dtype=compute_dtype,
                           batch_tile=batch_tile, single_buffer_weights=False)
        return jax.block_until_ready(out)


def init_aoe_params(key, input_dim, hidden_dim, output_dim, task_num, expert_num):
    """PyTorch-style uniform fan-in init; weights stored (modules, in, out)."""

    def linear(k, m, din, dout):
        kw, kb = jax.random.split(k)
        bound = 1.0 / (din ** 0.5)
        w = jax.random.uniform(kw, (m, din, dout), jnp.float32, -bound, bound)
        b = jax.random.uniform(kb, (m, 1, dout), jnp.float32, -bound, bound)
        return w, b

    keys = jax.random.split(key, 7)
    M = task_num + expert_num   # TaskNets and Experts share the same 3-layer shape
    params = {}
    params["qk_w1"], params["qk_b1"] = linear(keys[0], M, input_dim, hidden_dim)
    params["qk_w2"], params["qk_b2"] = linear(keys[1], M, hidden_dim, hidden_dim)
    params["qk_w3"], params["qk_b3"] = linear(keys[2], M, hidden_dim, hidden_dim)
    params["tw_w1"], params["tw_b1"] = linear(keys[3], task_num, hidden_dim, 128)
    params["tw_w2"], params["tw_b2"] = linear(keys[4], task_num, 128, 64)
    params["tw_w3"], params["tw_b3"] = linear(keys[5], task_num, 64, 16)
    params["tw_w4"], params["tw_b4"] = linear(keys[6], task_num, 16, output_dim)
    # dynamic_weights is a Parameter in the PyTorch module but unused in forward().
    params["dynamic_weights"] = jnp.ones((task_num,), jnp.float32)
    return params


def aoe_reference(x, params, task_num, expert_num):
    """Pure-JAX f32 reference mirroring the PyTorch forward."""
    T, E = task_num, expert_num

    def mlp3(h, m):
        for l in (1, 2, 3):
            h = h @ params[f"qk_w{l}"][m] + params[f"qk_b{l}"][m]
            h = jnp.where(h > 0, h, NEG_SLOPE * h)
        return h

    query = jnp.stack([mlp3(x, m) for m in range(T)])          # (T, B, H)
    key = jnp.stack([mlp3(x, T + m) for m in range(E)])        # (E, B, H)

    eps = 1e-8
    qn = jnp.maximum(jnp.linalg.norm(query, axis=-1), eps)
    kn = jnp.maximum(jnp.linalg.norm(key, axis=-1), eps)
    cos = jnp.einsum("tbh,ebh->teb", query, key) / (qn[:, None, :] * kn[None, :, :])
    alpha = cos.mean(axis=-1) / key.shape[1]
    alpha = jax.nn.softmax(alpha, axis=0)
    attention = jnp.einsum("te,ebh->tbh", alpha, key)
    tower_in = query + attention

    outs = []
    for t in range(T):
        h = tower_in[t]
        for l in (1, 2, 3, 4):
            h = h @ params[f"tw_w{l}"][t] + params[f"tw_b{l}"][t]
            if l < 4:
                h = jnp.where(h > 0, h, NEG_SLOPE * h)
        outs.append(h)
    return outs


if __name__ == "__main__":
    input_dim, hidden_dim, output_dim = 24, 32, 4
    task_num, expert_num = 2, 3
    batch = 8

    key = jax.random.PRNGKey(0)
    key, kx = jax.random.split(key)
    x = jax.random.normal(kx, (batch, input_dim), dtype=jnp.float32)
    params = init_aoe_params(key, input_dim, hidden_dim, output_dim,
                             task_num, expert_num)

    ref = aoe_reference(x, params, task_num, expert_num)

    # Exact-semantics check: f32 compute path, tight tolerance.
    outs_f32 = aoe_forward(x, params, task_num=task_num, expert_num=expert_num,
                           output_dim=output_dim, compute_dtype=jnp.float32)
    outs_f32 = jax.block_until_ready(outs_f32)
    assert len(outs_f32) == task_num
    for o, r in zip(outs_f32, ref):
        assert o.shape == (batch, output_dim)
        assert jnp.allclose(o, r, atol=1e-4, rtol=1e-4), "f32 path mismatch vs reference"

    # Default fast path: bf16 matmul inputs, f32 accumulation (looser tolerance).
    outs = aoe_forward(x, params, task_num=task_num, expert_num=expert_num,
                       output_dim=output_dim)
    outs = jax.block_until_ready(outs)
    for o, r in zip(outs, ref):
        assert o.shape == (batch, output_dim)
        assert jnp.allclose(o, r, atol=5e-2, rtol=5e-2), "bf16 path mismatch vs reference"

    print("KERNEL_OK")
</pallas_src>

<mosaic_0001>
module attributes {stable_mosaic.version = 11 : i64} {
  func.func @kernel(%arg0: i32, %arg1: i32, %arg2: memref<8x24xf32, #tpu.memory_space<vmem>>, %arg3: memref<1x24x32xf32, #tpu.memory_space<vmem>>, %arg4: memref<1x1x32xf32, #tpu.memory_space<vmem>>, %arg5: memref<1x32x32xf32, #tpu.memory_space<vmem>>, %arg6: memref<1x1x32xf32, #tpu.memory_space<vmem>>, %arg7: memref<1x32x128xf32, #tpu.memory_space<vmem>>, %arg8: memref<1x1x128xf32, #tpu.memory_space<vmem>>, %arg9: memref<1x8x128xf32, #tpu.memory_space<vmem>>) attributes {dimension_semantics = [#tpu.dimension_semantics<parallel>, #tpu.dimension_semantics<parallel>], iteration_bounds = array<i64: 5, 1>, scalar_prefetch = 0 : i64, scratch_operands = 0 : i64, tpu.core_type = #tpu.core_type<tc>, window_params = [{transform_indices = @transform_0, window_bounds = array<i64: 8, 24>}, {pipeline_mode = #tpu.pipeline_mode<synchronous>, transform_indices = @transform_1, window_bounds = array<i64: 1, 24, 32>}, {pipeline_mode = #tpu.pipeline_mode<synchronous>, transform_indices = @transform_2, window_bounds = array<i64: 1, 1, 32>}, {pipeline_mode = #tpu.pipeline_mode<synchronous>, transform_indices = @transform_3, window_bounds = array<i64: 1, 32, 32>}, {pipeline_mode = #tpu.pipeline_mode<synchronous>, transform_indices = @transform_4, window_bounds = array<i64: 1, 1, 32>}, {pipeline_mode = #tpu.pipeline_mode<synchronous>, transform_indices = @transform_5, window_bounds = array<i64: 1, 32, 128>}, {pipeline_mode = #tpu.pipeline_mode<synchronous>, transform_indices = @transform_6, window_bounds = array<i64: 1, 1, 128>}, {transform_indices = @transform_7, window_bounds = array<i64: 1, 8, 128>}]} {
    %c0 = arith.constant 0 : index
    %c0_0 = arith.constant 0 : index
    %0 = vector.load %arg2[%c0, %c0_0] : memref<8x24xf32, #tpu.memory_space<vmem>>, vector<8x24xf32>
    %c0_1 = arith.constant 0 : index
    %c0_2 = arith.constant 0 : index
    %c0_3 = arith.constant 0 : index
    %1 = vector.load %arg3[%c0_1, %c0_2, %c0_3] : memref<1x24x32xf32, #tpu.memory_space<vmem>>, vector<1x24x32xf32>
    %2 = vector.shape_cast %1 : vector<1x24x32xf32> to vector<24x32xf32>
    %cst = arith.constant dense<0.000000e+00> : vector<8x32xf32>
    %3 = tpu.matmul %0, %2, %cst {dimension_numbers = #tpu.dot_dimension_numbers<[1], [0], [0], [1], [0, 0, 1, 1], [], []>} : vector<8x24xf32>, vector<24x32xf32>, vector<8x32xf32> -> vector<8x32xf32>
    %c0_4 = arith.constant 0 : index
    %c0_5 = arith.constant 0 : index
    %c0_6 = arith.constant 0 : index
    %4 = vector.load %arg4[%c0_4, %c0_5, %c0_6] : memref<1x1x32xf32, #tpu.memory_space<vmem>>, vector<1x1x32xf32>
    %5 = vector.shape_cast %4 : vector<1x1x32xf32> to vector<1x32xf32>
    %6 = vector.broadcast %5 : vector<1x32xf32> to vector<8x32xf32>
    %7 = arith.addf %3, %6 : vector<8x32xf32>
    %cst_7 = arith.constant 0.000000e+00 : f32
    %8 = vector.broadcast %cst_7 : f32 to vector<8x32xf32>
    %9 = arith.cmpf ogt, %7, %8 : vector<8x32xf32>
    %cst_8 = arith.constant 0.00999999977 : f32
    %10 = vector.broadcast %cst_8 : f32 to vector<8x32xf32>
    %11 = arith.mulf %10, %7 : vector<8x32xf32>
    %12 = arith.select %9, %7, %11 : vector<8x32xi1>, vector<8x32xf32>
    %c0_9 = arith.constant 0 : index
    %c0_10 = arith.constant 0 : index
    %c0_11 = arith.constant 0 : index
    %13 = vector.load %arg5[%c0_9, %c0_10, %c0_11] : memref<1x32x32xf32, #tpu.memory_space<vmem>>, vector<1x32x32xf32>
    %14 = vector.shape_cast %13 : vector<1x32x32xf32> to vector<32x32xf32>
    %cst_12 = arith.constant dense<0.000000e+00> : vector<8x32xf32>
    %15 = tpu.matmul %12, %14, %cst_12 {dimension_numbers = #tpu.dot_dimension_numbers<[1], [0], [0], [1], [0, 0, 1, 1], [], []>} : vector<8x32xf32>, vector<32x32xf32>, vector<8x32xf32> -> vector<8x32xf32>
    %c0_13 = arith.constant 0 : index
    %c0_14 = arith.constant 0 : index
    %c0_15 = arith.constant 0 : index
    %16 = vector.load %arg6[%c0_13, %c0_14, %c0_15] : memref<1x1x32xf32, #tpu.memory_space<vmem>>, vector<1x1x32xf32>
    %17 = vector.shape_cast %16 : vector<1x1x32xf32> to vector<1x32xf32>
    %18 = vector.broadcast %17 : vector<1x32xf32> to vector<8x32xf32>
    %19 = arith.addf %15, %18 : vector<8x32xf32>
    %cst_16 = arith.constant 0.000000e+00 : f32
    %20 = vector.broadcast %cst_16 : f32 to vector<8x32xf32>
    %21 = arith.cmpf ogt, %19, %20 : vector<8x32xf32>
    %cst_17 = arith.constant 0.00999999977 : f32
    %22 = vector.broadcast %cst_17 : f32 to vector<8x32xf32>
    %23 = arith.mulf %22, %19 : vector<8x32xf32>
    %24 = arith.select %21, %19, %23 : vector<8x32xi1>, vector<8x32xf32>
    %c0_18 = arith.constant 0 : index
    %c0_19 = arith.constant 0 : index
    %c0_20 = arith.constant 0 : index
    %25 = vector.load %arg7[%c0_18, %c0_19, %c0_20] : memref<1x32x128xf32, #tpu.memory_space<vmem>>, vector<1x32x128xf32>
    %26 = vector.shape_cast %25 : vector<1x32x128xf32> to vector<32x128xf32>
    %cst_21 = arith.constant dense<0.000000e+00> : vector<8x128xf32>
    %27 = tpu.matmul %24, %26, %cst_21 {dimension_numbers = #tpu.dot_dimension_numbers<[1], [0], [0], [1], [0, 0, 1, 1], [], []>} : vector<8x32xf32>, vector<32x128xf32>, vector<8x128xf32> -> vector<8x128xf32>
    %c0_22 = arith.constant 0 : index
    %c0_23 = arith.constant 0 : index
    %c0_24 = arith.constant 0 : index
    %28 = vector.load %arg8[%c0_22, %c0_23, %c0_24] : memref<1x1x128xf32, #tpu.memory_space<vmem>>, vector<1x1x128xf32>
    %29 = vector.shape_cast %28 : vector<1x1x128xf32> to vector<1x128xf32>
    %30 = vector.broadcast %29 : vector<1x128xf32> to vector<8x128xf32>
    %31 = arith.addf %27, %30 : vector<8x128xf32>
    %cst_25 = arith.constant 0.000000e+00 : f32
    %32 = vector.broadcast %cst_25 : f32 to vector<8x128xf32>
    %33 = arith.cmpf ogt, %31, %32 : vector<8x128xf32>
    %cst_26 = arith.constant 0.00999999977 : f32
    %34 = vector.broadcast %cst_26 : f32 to vector<8x128xf32>
    %35 = arith.mulf %34, %31 : vector<8x128xf32>
    %36 = arith.select %33, %31, %35 : vector<8x128xi1>, vector<8x128xf32>
    %c0_27 = arith.constant 0 : index
    %c0_28 = arith.constant 0 : index
    %c0_29 = arith.constant 0 : index
    %37 = vector.load %arg9[%c0_27, %c0_28, %c0_29] : memref<1x8x128xf32, #tpu.memory_space<vmem>>, vector<1x8x128xf32>
    %38 = vector.shape_cast %37 : vector<1x8x128xf32> to vector<8x128xf32>
    %39 = vector.shape_cast %36 : vector<8x128xf32> to vector<1x8x128xf32>
    tpu.vector_store %arg9[%c0_27, %c0_28, %c0_29], %39 {strides = array<i32>} : memref<1x8x128xf32, #tpu.memory_space<vmem>>, vector<1x8x128xf32>,
    return
  }
  func.func @transform_0(%arg0: i32, %arg1: i32) -> (i32, i32) {
    %c0_i32 = arith.constant 0 : i32
    %c0_i32_0 = arith.constant 0 : i32
    return %arg1, %c0_i32 : i32, i32
  }
  func.func @transform_1(%arg0: i32, %arg1: i32) -> (i32, i32, i32) {
    %c0_i32 = arith.constant 0 : i32
    %c0_i32_0 = arith.constant 0 : i32
    %c0_i32_1 = arith.constant 0 : i32
    return %arg0, %c0_i32, %c0_i32_0 : i32, i32, i32
  }
  func.func @transform_2(%arg0: i32, %arg1: i32) -> (i32, i32, i32) {
    %c0_i32 = arith.constant 0 : i32
    %c0_i32_0 = arith.constant 0 : i32
    %c0_i32_1 = arith.constant 0 : i32
    return %arg0, %c0_i32, %c0_i32_0 : i32, i32, i32
  }
  func.func @transform_3(%arg0: i32, %arg1: i32) -> (i32, i32, i32) {
    %c0_i32 = arith.constant 0 : i32
    %c0_i32_0 = arith.constant 0 : i32
    %c0_i32_1 = arith.constant 0 : i32
    return %arg0, %c0_i32, %c0_i32_0 : i32, i32, i32
  }
  func.func @transform_4(%arg0: i32, %arg1: i32) -> (i32, i32, i32) {
    %c0_i32 = arith.constant 0 : i32
    %c0_i32_0 = arith.constant 0 : i32
    %c0_i32_1 = arith.constant 0 : i32
    return %arg0, %c0_i32, %c0_i32_0 : i32, i32, i32
  }
  func.func @transform_5(%arg0: i32, %arg1: i32) -> (i32, i32, i32) {
    %c0_i32 = arith.constant 0 : i32
    %c0_i32_0 = arith.constant 0 : i32
    %c0_i32_1 = arith.constant 0 : i32
    return %arg0, %c0_i32, %c0_i32_0 : i32, i32, i32
  }
  func.func @transform_6(%arg0: i32, %arg1: i32) -> (i32, i32, i32) {
    %c0_i32 = arith.constant 0 : i32
    %c0_i32_0 = arith.constant 0 : i32
    %c0_i32_1 = arith.constant 0 : i32
    return %arg0, %c0_i32, %c0_i32_0 : i32, i32, i32
  }
  func.func @transform_7(%arg0: i32, %arg1: i32) -> (i32, i32, i32) {
    %c0_i32 = arith.constant 0 : i32
    %c0_i32_0 = arith.constant 0 : i32
    return %arg0, %arg1, %c0_i32 : i32, i32, i32
  }
}

module attributes {stable_mosaic.version = 11 : i64} {
  func.func @kernel(%arg0: i32, %arg1: i32, %arg2: memref<8x24xf32, #tpu.memory_space<vmem>>, %arg3: memref<1x24x32xf32, #tpu.memory_space<vmem>>, %arg4: memref<1x1x32xf32, #tpu.memory_space<vmem>>, %arg5: memref<1x32x32xf32, #tpu.memory_space<vmem>>, %arg6: memref<1x1x32xf32, #tpu.memory_space<vmem>>, %arg7: memref<1x32x128xf32, #tpu.memory_space<vmem>>, %arg8: memref<1x1x128xf32, #tpu.memory_space<vmem>>, %arg9: memref<1x8x128xf32, #tpu.memory_space<vmem>>) attributes {dimension_semantics = [#tpu.dimension_semantics<parallel>, #tpu.dimension_semantics<parallel>], iteration_bounds = array<i64: 5, 1>, scalar_prefetch = 0 : i64, scratch_operands = 0 : i64, tpu.core_type = #tpu.core_type<tc>, window_params = [{transform_indices = @transform_0, window_bounds = array<i64: 8, 24>}, {transform_indices = @transform_1, window_bounds = array<i64: 1, 24, 32>}, {transform_indices = @transform_2, window_bounds = array<i64: 1, 1, 32>}, {transform_indices = @transform_3, window_bounds = array<i64: 1, 32, 32>}, {transform_indices = @transform_4, window_bounds = array<i64: 1, 1, 32>}, {transform_indices = @transform_5, window_bounds = array<i64: 1, 32, 128>}, {transform_indices = @transform_6, window_bounds = array<i64: 1, 1, 128>}, {transform_indices = @transform_7, window_bounds = array<i64: 1, 8, 128>}]} {
    %c0 = arith.constant 0 : index
    %c0_0 = arith.constant 0 : index
    %0 = vector.load %arg2[%c0, %c0_0] : memref<8x24xf32, #tpu.memory_space<vmem>>, vector<8x24xf32>
    %c0_1 = arith.constant 0 : index
    %c0_2 = arith.constant 0 : index
    %c0_3 = arith.constant 0 : index
    %1 = vector.load %arg3[%c0_1, %c0_2, %c0_3] : memref<1x24x32xf32, #tpu.memory_space<vmem>>, vector<1x24x32xf32>
    %2 = vector.shape_cast %1 : vector<1x24x32xf32> to vector<24x32xf32>
    %cst = arith.constant dense<0.000000e+00> : vector<8x32xf32>
    %3 = tpu.matmul %0, %2, %cst {dimension_numbers = #tpu.dot_dimension_numbers<[1], [0], [0], [1], [0, 0, 1, 1], [], []>} : vector<8x24xf32>, vector<24x32xf32>, vector<8x32xf32> -> vector<8x32xf32>
    %c0_4 = arith.constant 0 : index
    %c0_5 = arith.constant 0 : index
    %c0_6 = arith.constant 0 : index
    %4 = vector.load %arg4[%c0_4, %c0_5, %c0_6] : memref<1x1x32xf32, #tpu.memory_space<vmem>>, vector<1x1x32xf32>
    %5 = vector.shape_cast %4 : vector<1x1x32xf32> to vector<1x32xf32>
    %6 = vector.broadcast %5 : vector<1x32xf32> to vector<8x32xf32>
    %7 = arith.addf %3, %6 : vector<8x32xf32>
    %cst_7 = arith.constant 0.000000e+00 : f32
    %8 = vector.broadcast %cst_7 : f32 to vector<8x32xf32>
    %9 = arith.cmpf ogt, %7, %8 : vector<8x32xf32>
    %cst_8 = arith.constant 0.00999999977 : f32
    %10 = vector.broadcast %cst_8 : f32 to vector<8x32xf32>
    %11 = arith.mulf %10, %7 : vector<8x32xf32>
    %12 = arith.select %9, %7, %11 : vector<8x32xi1>, vector<8x32xf32>
    %c0_9 = arith.constant 0 : index
    %c0_10 = arith.constant 0 : index
    %c0_11 = arith.constant 0 : index
    %13 = vector.load %arg5[%c0_9, %c0_10, %c0_11] : memref<1x32x32xf32, #tpu.memory_space<vmem>>, vector<1x32x32xf32>
    %14 = vector.shape_cast %13 : vector<1x32x32xf32> to vector<32x32xf32>
    %cst_12 = arith.constant dense<0.000000e+00> : vector<8x32xf32>
    %15 = tpu.matmul %12, %14, %cst_12 {dimension_numbers = #tpu.dot_dimension_numbers<[1], [0], [0], [1], [0, 0, 1, 1], [], []>} : vector<8x32xf32>, vector<32x32xf32>, vector<8x32xf32> -> vector<8x32xf32>
    %c0_13 = arith.constant 0 : index
    %c0_14 = arith.constant 0 : index
    %c0_15 = arith.constant 0 : index
    %16 = vector.load %arg6[%c0_13, %c0_14, %c0_15] : memref<1x1x32xf32, #tpu.memory_space<vmem>>, vector<1x1x32xf32>
    %17 = vector.shape_cast %16 : vector<1x1x32xf32> to vector<1x32xf32>
    %18 = vector.broadcast %17 : vector<1x32xf32> to vector<8x32xf32>
    %19 = arith.addf %15, %18 : vector<8x32xf32>
    %cst_16 = arith.constant 0.000000e+00 : f32
    %20 = vector.broadcast %cst_16 : f32 to vector<8x32xf32>
    %21 = arith.cmpf ogt, %19, %20 : vector<8x32xf32>
    %cst_17 = arith.constant 0.00999999977 : f32
    %22 = vector.broadcast %cst_17 : f32 to vector<8x32xf32>
    %23 = arith.mulf %22, %19 : vector<8x32xf32>
    %24 = arith.select %21, %19, %23 : vector<8x32xi1>, vector<8x32xf32>
    %c0_18 = arith.constant 0 : index
    %c0_19 = arith.constant 0 : index
    %c0_20 = arith.constant 0 : index
    %25 = vector.load %arg7[%c0_18, %c0_19, %c0_20] : memref<1x32x128xf32, #tpu.memory_space<vmem>>, vector<1x32x128xf32>
    %26 = vector.shape_cast %25 : vector<1x32x128xf32> to vector<32x128xf32>
    %cst_21 = arith.constant dense<0.000000e+00> : vector<8x128xf32>
    %27 = tpu.matmul %24, %26, %cst_21 {dimension_numbers = #tpu.dot_dimension_numbers<[1], [0], [0], [1], [0, 0, 1, 1], [], []>} : vector<8x32xf32>, vector<32x128xf32>, vector<8x128xf32> -> vector<8x128xf32>
    %c0_22 = arith.constant 0 : index
    %c0_23 = arith.constant 0 : index
    %c0_24 = arith.constant 0 : index
    %28 = vector.load %arg8[%c0_22, %c0_23, %c0_24] : memref<1x1x128xf32, #tpu.memory_space<vmem>>, vector<1x1x128xf32>
    %29 = vector.shape_cast %28 : vector<1x1x128xf32> to vector<1x128xf32>
    %30 = vector.broadcast %29 : vector<1x128xf32> to vector<8x128xf32>
    %31 = arith.addf %27, %30 : vector<8x128xf32>
    %cst_25 = arith.constant 0.000000e+00 : f32
    %32 = vector.broadcast %cst_25 : f32 to vector<8x128xf32>
    %33 = arith.cmpf ogt, %31, %32 : vector<8x128xf32>
    %cst_26 = arith.constant 0.00999999977 : f32
    %34 = vector.broadcast %cst_26 : f32 to vector<8x128xf32>
    %35 = arith.mulf %34, %31 : vector<8x128xf32>
    %36 = arith.select %33, %31, %35 : vector<8x128xi1>, vector<8x128xf32>
    %c0_27 = arith.constant 0 : index
    %c0_28 = arith.constant 0 : index
    %c0_29 = arith.constant 0 : index
    %37 = vector.load %arg9[%c0_27, %c0_28, %c0_29] : memref<1x8x128xf32, #tpu.memory_space<vmem>>, vector<1x8x128xf32>
    %38 = vector.shape_cast %37 : vector<1x8x128xf32> to vector<8x128xf32>
    %39 = vector.shape_cast %36 : vector<8x128xf32> to vector<1x8x128xf32>
    tpu.vector_store %arg9[%c0_27, %c0_28, %c0_29], %39 {strides = array<i32>} : memref<1x8x128xf32, #tpu.memory_space<vmem>>, vector<1x8x128xf32>,
    return
  }
  func.func @transform_0(%arg0: i32, %arg1: i32) -> (i32, i32) {
    %c0_i32 = arith.constant 0 : i32
    %c0_i32_0 = arith.constant 0 : i32
    return %arg1, %c0_i32 : i32, i32
  }
  func.func @transform_1(%arg0: i32, %arg1: i32) -> (i32, i32, i32) {
    %c0_i32 = arith.constant 0 : i32
    %c0_i32_0 = arith.constant 0 : i32
    %c0_i32_1 = arith.constant 0 : i32
    return %arg0, %c0_i32, %c0_i32_0 : i32, i32, i32
  }
  func.func @transform_2(%arg0: i32, %arg1: i32) -> (i32, i32, i32) {
    %c0_i32 = arith.constant 0 : i32
    %c0_i32_0 = arith.constant 0 : i32
    %c0_i32_1 = arith.constant 0 : i32
    return %arg0, %c0_i32, %c0_i32_0 : i32, i32, i32
  }
  func.func @transform_3(%arg0: i32, %arg1: i32) -> (i32, i32, i32) {
    %c0_i32 = arith.constant 0 : i32
    %c0_i32_0 = arith.constant 0 : i32
    %c0_i32_1 = arith.constant 0 : i32
    return %arg0, %c0_i32, %c0_i32_0 : i32, i32, i32
  }
  func.func @transform_4(%arg0: i32, %arg1: i32) -> (i32, i32, i32) {
    %c0_i32 = arith.constant 0 : i32
    %c0_i32_0 = arith.constant 0 : i32
    %c0_i32_1 = arith.constant 0 : i32
    return %arg0, %c0_i32, %c0_i32_0 : i32, i32, i32
  }
  func.func @transform_5(%arg0: i32, %arg1: i32) -> (i32, i32, i32) {
    %c0_i32 = arith.constant 0 : i32
    %c0_i32_0 = arith.constant 0 : i32
    %c0_i32_1 = arith.constant 0 : i32
    return %arg0, %c0_i32, %c0_i32_0 : i32, i32, i32
  }
  func.func @transform_6(%arg0: i32, %arg1: i32) -> (i32, i32, i32) {
    %c0_i32 = arith.constant 0 : i32
    %c0_i32_0 = arith.constant 0 : i32
    %c0_i32_1 = arith.constant 0 : i32
    return %arg0, %c0_i32, %c0_i32_0 : i32, i32, i32
  }
  func.func @transform_7(%arg0: i32, %arg1: i32) -> (i32, i32, i32) {
    %c0_i32 = arith.constant 0 : i32
    %c0_i32_0 = arith.constant 0 : i32
    return %arg0, %arg1, %c0_i32 : i32, i32, i32
  }
}

</mosaic_0001>

<llo_original>
// kernel: tpu_custom_call.1
$region0: #{tpu_custom_call.1}
  #allocation0 [shape = 'u32[]', space=smem, size = 0x4, offset = 0x4, fixed_abs, tag = 'smem constant byte address 0x4 - core index']
  #allocation1 [shape = 'u32[144,128]{1,0:T(1,128)}', space=vmem, size = 0x12000, scoped, tag = 'internal scratch']
  %s0 = inlined_call_operand.hbm [shape: f32[8,24], index: 0, kind: input, shape index: {}]
  %s1 = inlined_call_operand.hbm [shape: f32[5,24,32], index: 1, kind: input, shape index: {}]
  %s2 = inlined_call_operand.hbm [shape: f32[5,1,32], index: 2, kind: input, shape index: {}]
  %s3 = inlined_call_operand.hbm [shape: f32[5,32,32], index: 3, kind: input, shape index: {}]
  %s4 = inlined_call_operand.vmem [shape: f32[5,1,32], index: 4, kind: input, shape index: {}]
  %s5 = inlined_call_operand.hbm [shape: f32[5,32,128], index: 5, kind: input, shape index: {}]
  %s6 = inlined_call_operand.vmem [shape: f32[5,1,128], index: 6, kind: input, shape index: {}]
  %s7 = inlined_call_operand.hbm [shape: f32[5,8,128], index: 7, kind: output, shape index: {}]
  %s8 = sld [smem:[#allocation0]]
  $region81: #{tpu_custom_call.1} parent=0
    _
  %s10 = ssub.s32 1, %s8
  %s11 = scalar_select 0, %s10, %s8
  $region1: #{tpu_custom_call.1} parent=0
    #allocation2 [shape = 'u8[4096]{0}', space=vmem, size = 0x1000, scoped, tag = 'input window, operand 0, single buffered']
    #allocation3 [shape = 's32[2]{0}', space=sflag, size = 0x8, scoped, tag = 'scoped memory for tpu_custom_call.1']
    #allocation4 [shape = 's32[2]{0}', space=sflag, size = 0x8, scoped, tag = 'scoped memory for tpu_custom_call.1']
    #allocation5 [shape = 'u8[12288]{0}', space=vmem, size = 0x3000, scoped, tag = 'input window, operand 1, single buffered']
    #allocation6 [shape = 's32[1]{0}', space=sflag, size = 0x4, scoped, tag = 'scoped memory for tpu_custom_call.1']
    #allocation7 [shape = 'u8[512]{0}', space=vmem, size = 0x400, scoped, tag = 'input window, operand 2, single buffered']
    #allocation8 [shape = 'u8[16384]{0}', space=vmem, size = 0x4000, scoped, tag = 'input window, operand 3, single buffered']
    #allocation9 [shape = 's32[1]{0}', space=sflag, size = 0x4, scoped, tag = 'scoped memory for tpu_custom_call.1']
    #allocation10 [shape = 'u8[16384]{0}', space=vmem, size = 0x4000, scoped, tag = 'input window, operand 5, single buffered']
    #allocation11 [shape = 'u8[8192]{0}', space=vmem, size = 0x2000, scoped, tag = 'output window, operand 0']
    %12 = vsyncpa [#allocation3], 0
    %13 = vsyncpa [#allocation6], 0
    %14 = vsyncpa [#allocation9], 0
    %15 = vsyncpa [#allocation4], 0
    %s16 = scalar_lea.sflag [#allocation4], 1
    %17 = vsyncpa %s16, 0
    loop: start=0, step=1, limit=7
    $region2: #{tpu_custom_call.1} parent=1 // loop_pre_header
      _
    $region3: #{tpu_custom_call.1} parent=1 // loop_header
      %s19 = sphi 0, %s23
      %p20 = scmp.ge.s32.totalorder %s19, 7
      %s26 = sphi 0, %s38
      %s27 = sphi 0, %s34
      %s28 = sphi 0, %s26
      %s29 = sphi 0, %s27
      %s30 = sphi 0, %s28
      %s31 = sphi 0, %s29
      %s41 = sphi 0, %s43
      %s44 = sphi 0, %s41
      %s45 = sphi 0, %s44
      %s61 = sphi 0, %s45
      %s67 = sphi 0, %s69
      %s70 = sphi 0, %s67
      %s71 = sphi 0, %s70
      %s87 = sphi 0, %s71
      %s93 = sphi 0, %s95
      %s96 = sphi 0, %s93
      %s97 = sphi 0, %s96
      %s113 = sphi 0, %s97
      %s119 = sphi 0, %s121
      %s122 = sphi 0, %s119
      %s123 = sphi 0, %s122
      %s139 = sphi 0, %s123
      %s145 = sphi 0, %s147
      %s148 = sphi 0, %s145
      %s149 = sphi 0, %s148
      %s165 = sphi 0, %s149
      %s171 = sphi 0, %s173
      %s174 = sphi 0, %s171
      %s175 = sphi 0, %s174
      %s191 = sphi 0, %s175
      %s197 = sphi 0, %s199
      %s200 = sphi 0, %s197
      %s201 = sphi 0, %s200
      %s217 = sphi 0, %s201
      %s225 = sphi 0, %s227
      %s228 = sphi 0, %s225
      %s229 = sphi 0, %s228
      %s245 = sphi 0, %s229
    $region4: #{tpu_custom_call.1} parent=1 // loop_header_branch
      %22 = sbr.rel (%p20) target = $region8
    $region5: #{tpu_custom_call.1} parent=1 // loop_body
      %s24 = ssub.s32 %s19, 1
      %s25 = ssub.s32 %s19, 2
      %s32 = sadd.s32 1, %s27
      %p33 = scmp.ge.s32.totalorder %s32, 1
      %s34 = scalar_select %p33, 0, %s32
      %s35 = sadd.s32 1, %s26
      %s36 = scalar_select %p33, %s35, %s26
      %p37 = scmp.ge.s32.totalorder %s36, 5
      %s38 = scalar_select %p37, 0, %s36
      %s39 = ssub.s32 %s27, %s34
      %p40 = scmp.eq.s32.totalorder %s39, 0
      %s42 = sadd.s32 %s41, 1
      %s43 = scalar_select %p40, %s41, %s42
      %p46 = pneg %p40
      %p47 = scmp.eq.s32.totalorder %s19, 4
      %p48 = por %p46, %p47
      %p49 = scmp.ne.s32.totalorder %s41, %s44
      %p50 = scmp.eq.s32.totalorder %s19, 0
      %p51 = por %p49, %p50
      %p52 = scmp.ne.s32.totalorder %s41, %s44
      %p53 = scmp.eq.s32.totalorder %s24, 4
      %p54 = por %p52, %p53
      %p55 = scmp.ne.s32.totalorder %s44, %s45
      %p56 = scmp.eq.s32.totalorder %s24, 0
      %p57 = por %p55, %p56
      %p58 = scmp.ne.s32.totalorder %s44, %s45
      %p59 = scmp.eq.s32.totalorder %s25, 4
      %p60 = por %p58, %p59
      %p62 = scmp.ne.s32.totalorder %s45, %s61
      %p63 = scmp.eq.s32.totalorder %s25, 0
      %p64 = por %p62, %p63
      %s65 = ssub.s32 %s26, %s38
      %p66 = scmp.eq.s32.totalorder %s65, 0
      %s68 = sadd.s32 %s67, 1
      %s69 = scalar_select %p66, %s67, %s68
      %p72 = pneg %p66
      %p73 = scmp.eq.s32.totalorder %s19, 4
      %p74 = por %p72, %p73
      %p75 = scmp.ne.s32.totalorder %s67, %s70
      %p76 = scmp.eq.s32.totalorder %s19, 0
      %p77 = por %p75, %p76
      %p78 = scmp.ne.s32.totalorder %s67, %s70
      %p79 = scmp.eq.s32.totalorder %s24, 4
      %p80 = por %p78, %p79
      %p81 = scmp.ne.s32.totalorder %s70, %s71
      %p82 = scmp.eq.s32.totalorder %s24, 0
      %p83 = por %p81, %p82
      %p84 = scmp.ne.s32.totalorder %s70, %s71
      %p85 = scmp.eq.s32.totalorder %s25, 4
      %p86 = por %p84, %p85
      %p88 = scmp.ne.s32.totalorder %s71, %s87
      %p89 = scmp.eq.s32.totalorder %s25, 0
      %p90 = por %p88, %p89
      %s91 = ssub.s32 %s26, %s38
      %p92 = scmp.eq.s32.totalorder %s91, 0
      %s94 = sadd.s32 %s93, 1
      %s95 = scalar_select %p92, %s93, %s94
      %p98 = pneg %p92
      %p99 = scmp.eq.s32.totalorder %s19, 4
      %p100 = por %p98, %p99
      %p101 = scmp.ne.s32.totalorder %s93, %s96
      %p102 = scmp.eq.s32.totalorder %s19, 0
      %p103 = por %p101, %p102
      %p104 = scmp.ne.s32.totalorder %s93, %s96
      %p105 = scmp.eq.s32.totalorder %s24, 4
      %p106 = por %p104, %p105
      %p107 = scmp.ne.s32.totalorder %s96, %s97
      %p108 = scmp.eq.s32.totalorder %s24, 0
      %p109 = por %p107, %p108
      %p110 = scmp.ne.s32.totalorder %s96, %s97
      %p111 = scmp.eq.s32.totalorder %s25, 4
      %p112 = por %p110, %p111
      %p114 = scmp.ne.s32.totalorder %s97, %s113
      %p115 = scmp.eq.s32.totalorder %s25, 0
      %p116 = por %p114, %p115
      %s117 = ssub.s32 %s26, %s38
      %p118 = scmp.eq.s32.totalorder %s117, 0
      %s120 = sadd.s32 %s119, 1
      %s121 = scalar_select %p118, %s119, %s120
      %p124 = pneg %p118
      %p125 = scmp.eq.s32.totalorder %s19, 4
      %p126 = por %p124, %p125
      %p127 = scmp.ne.s32.totalorder %s119, %s122
      %p128 = scmp.eq.s32.totalorder %s19, 0
      %p129 = por %p127, %p128
      %p130 = scmp.ne.s32.totalorder %s119, %s122
      %p131 = scmp.eq.s32.totalorder %s24, 4
      %p132 = por %p130, %p131
      %p133 = scmp.ne.s32.totalorder %s122, %s123
      %p134 = scmp.eq.s32.totalorder %s24, 0
      %p135 = por %p133, %p134
      %p136 = scmp.ne.s32.totalorder %s122, %s123
      %p137 = scmp.eq.s32.totalorder %s25, 4
      %p138 = por %p136, %p137
      %p140 = scmp.ne.s32.totalorder %s123, %s139
      %p141 = scmp.eq.s32.totalorder %s25, 0
      %p142 = por %p140, %p141
      %s143 = ssub.s32 %s26, %s38
      %p144 = scmp.eq.s32.totalorder %s143, 0
      %s146 = sadd.s32 %s145, 1
      %s147 = scalar_select %p144, %s145, %s146
      %p150 = pneg %p144
      %p151 = scmp.eq.s32.totalorder %s19, 4
      %p152 = por %p150, %p151
      %p153 = scmp.ne.s32.totalorder %s145, %s148
      %p154 = scmp.eq.s32.totalorder %s19, 0
      %p155 = por %p153, %p154
      %p156 = scmp.ne.s32.totalorder %s145, %s148
      %p157 = scmp.eq.s32.totalorder %s24, 4
      %p158 = por %p156, %p157
      %p159 = scmp.ne.s32.totalorder %s148, %s149
      %p160 = scmp.eq.s32.totalorder %s24, 0
      %p161 = por %p159, %p160
      %p162 = scmp.ne.s32.totalorder %s148, %s149
      %p163 = scmp.eq.s32.totalorder %s25, 4
      %p164 = por %p162, %p163
      %p166 = scmp.ne.s32.totalorder %s149, %s165
      %p167 = scmp.eq.s32.totalorder %s25, 0
      %p168 = por %p166, %p167
      %s169 = ssub.s32 %s26, %s38
      %p170 = scmp.eq.s32.totalorder %s169, 0
      %s172 = sadd.s32 %s171, 1
      %s173 = scalar_select %p170, %s171, %s172
      %p176 = pneg %p170
      %p177 = scmp.eq.s32.totalorder %s19, 4
      %p178 = por %p176, %p177
      %p179 = scmp.ne.s32.totalorder %s171, %s174
      %p180 = scmp.eq.s32.totalorder %s19, 0
      %p181 = por %p179, %p180
      %p182 = scmp.ne.s32.totalorder %s171, %s174
      %p183 = scmp.eq.s32.totalorder %s24, 4
      %p184 = por %p182, %p183
      %p185 = scmp.ne.s32.totalorder %s174, %s175
      %p186 = scmp.eq.s32.totalorder %s24, 0
      %p187 = por %p185, %p186
      %p188 = scmp.ne.s32.totalorder %s174, %s175
      %p189 = scmp.eq.s32.totalorder %s25, 4
      %p190 = por %p188, %p189
      %p192 = scmp.ne.s32.totalorder %s175, %s191
      %p193 = scmp.eq.s32.totalorder %s25, 0
      %p194 = por %p192, %p193
      %s195 = ssub.s32 %s26, %s38
      %p196 = scmp.eq.s32.totalorder %s195, 0
      %s198 = sadd.s32 %s197, 1
      %s199 = scalar_select %p196, %s197, %s198
      %p202 = pneg %p196
      %p203 = scmp.eq.s32.totalorder %s19, 4
      %p204 = por %p202, %p203
      %p205 = scmp.ne.s32.totalorder %s197, %s200
      %p206 = scmp.eq.s32.totalorder %s19, 0
      %p207 = por %p205, %p206
      %p208 = scmp.ne.s32.totalorder %s197, %s200
      %p209 = scmp.eq.s32.totalorder %s24, 4
      %p210 = por %p208, %p209
      %p211 = scmp.ne.s32.totalorder %s200, %s201
      %p212 = scmp.eq.s32.totalorder %s24, 0
      %p213 = por %p211, %p212
      %p214 = scmp.ne.s32.totalorder %s200, %s201
      %p215 = scmp.eq.s32.totalorder %s25, 4
      %p216 = por %p214, %p215
      %p218 = scmp.ne.s32.totalorder %s201, %s217
      %p219 = scmp.eq.s32.totalorder %s25, 0
      %p220 = por %p218, %p219
      %s221 = ssub.s32 %s26, %s38
      %s222 = ssub.s32 %s27, %s34
      %s223 = sor.u32 %s221, %s222
      %p224 = scmp.eq.s32.totalorder %s223, 0
      %s226 = sadd.s32 %s225, 1
      %s227 = scalar_select %p224, %s225, %s226
      %p230 = pneg %p224
      %p231 = scmp.eq.s32.totalorder %s19, 4
      %p232 = por %p230, %p231
      %p233 = scmp.ne.s32.totalorder %s225, %s228
      %p234 = scmp.eq.s32.totalorder %s19, 0
      %p235 = por %p233, %p234
      %p236 = scmp.ne.s32.totalorder %s225, %s228
      %p237 = scmp.eq.s32.totalorder %s24, 4
      %p238 = por %p236, %p237
      %p239 = scmp.ne.s32.totalorder %s228, %s229
      %p240 = scmp.eq.s32.totalorder %s24, 0
      %p241 = por %p239, %p240
      %p242 = scmp.ne.s32.totalorder %s228, %s229
      %p243 = scmp.eq.s32.totalorder %s25, 4
      %p244 = por %p242, %p243
      %p246 = scmp.ne.s32.totalorder %s229, %s245
      %p247 = scmp.eq.s32.totalorder %s25, 0
      %p248 = por %p246, %p247
      %p249 = scmp.le.s32.totalorder 1, %s19
      %p250 = scmp.lt.s32.totalorder %s19, 6
      %p251 = pnand %p249, %p250
      %p252 = pneg %p251
      // Predicated region
      $region9: #{tpu_custom_call.1} parent=5 // pred_check
        _
      $region10: #{tpu_custom_call.1} parent=5 // pred_check_branch
        %254 = sbr.rel (%p251) target = $region12
      $region11: #{tpu_custom_call.1} parent=5 // pred_region
        %s255 = ssub.s32 %s19, 1
        // Predicated region
        $region13: #{tpu_custom_call.1} parent=11 // pred_check
          %p256 = pneg %p57
        $region14: #{tpu_custom_call.1} parent=11 // pred_check_branch
          %258 = sbr.rel (%p256) target = $region16
        $region15: #{tpu_custom_call.1} parent=11 // pred_region
          %s260 = ssub.s32 128, 128
          %261 = vsyncadd [#allocation3], %s260
          %s262 = smul.addr %s29, 128
          %s263 = scalar_lea.hbm %s0, %s262
          %s265 = sshll.u32 [#allocation2], 4
          %s266 = int_to_ptr.vmem [resolvable:$true] %s265
          %268 = dma.hbm_to_vmem [thread:$0]  %s263, 128, %s266, [#allocation3]
        $region16: #{tpu_custom_call.1} parent=11 // pred_fallthru
          _
        // Predicated region
        $region17: #{tpu_custom_call.1} parent=11 // pred_check
          %p269 = pneg %p83
        $region18: #{tpu_custom_call.1} parent=11 // pred_check_branch
          %271 = sbr.rel (%p269) target = $region20
        $region19: #{tpu_custom_call.1} parent=11 // pred_region
          %s273 = ssub.s32 384, 384
          %274 = vsyncadd [#allocation6], %s273
          %s275 = smul.addr %s28, 3
          %s276 = smul.addr %s275, 128
          %s277 = scalar_lea.hbm %s1, %s276
          %s278 = sshll.u32 [#allocation5], 4
          %s279 = int_to_ptr.vmem [resolvable:$true] %s278
          %284 = dma.hbm_to_vmem [thread:$0]  %s277, 384, %s279, [#allocation6], 128, 128, 8
        $region20: #{tpu_custom_call.1} parent=11 // pred_fallthru
          _
        // Predicated region
        $region21: #{tpu_custom_call.1} parent=11 // pred_check
          %p285 = pneg %p109
        $region22: #{tpu_custom_call.1} parent=11 // pred_check_branch
          %287 = sbr.rel (%p285) target = $region24
        $region23: #{tpu_custom_call.1} parent=11 // pred_region
          %s289 = ssub.s32 16, 16
          %290 = vsyncadd [#allocation6], %s289
          %s291 = smul.addr %s28, 16
          %s292 = scalar_lea.hbm %s2, %s291
          %s294 = sshll.u32 [#allocation7], 4
          %s295 = int_to_ptr.vmem [resolvable:$true] %s294
          %297 = dma.hbm_to_vmem [thread:$0]  %s292, 16, %s295, [#allocation6]
        $region24: #{tpu_custom_call.1} parent=11 // pred_fallthru
          _
        // Predicated region
        $region25: #{tpu_custom_call.1} parent=11 // pred_check
          %p298 = pneg %p135
        $region26: #{tpu_custom_call.1} parent=11 // pred_check_branch
          %300 = sbr.rel (%p298) target = $region28
        $region27: #{tpu_custom_call.1} parent=11 // pred_region
          %s302 = ssub.s32 512, 512
          %303 = vsyncadd [#allocation9], %s302
          %s304 = smul.addr %s28, 4
          %s305 = smul.addr %s304, 128
          %s306 = scalar_lea.hbm %s3, %s305
          %s307 = sshll.u32 [#allocation8], 4
          %s308 = int_to_ptr.vmem [resolvable:$true] %s307
          %313 = dma.hbm_to_vmem [thread:$0]  %s306, 512, %s308, [#allocation9], 128, 128, 8
        $region28: #{tpu_custom_call.1} parent=11 // pred_fallthru
          _
        // Predicated region
        $region29: #{tpu_custom_call.1} parent=11 // pred_check
          %p314 = pneg %p161
        $region30: #{tpu_custom_call.1} parent=11 // pred_check_branch
          %316 = sbr.rel (%p314) target = $region32
        $region31: #{tpu_custom_call.1} parent=11 // pred_region
          %p317 = scmp.lt.s32.totalorder %s28, 4
          %s318 = scalar_select %p317, %s28, 4
          %s319 = scalar_lea.vmem %s4, %s318
        $region32: #{tpu_custom_call.1} parent=11 // pred_fallthru
          _
        // Predicated region
        $region33: #{tpu_custom_call.1} parent=11 // pred_check
          %p320 = pneg %p187
        $region34: #{tpu_custom_call.1} parent=11 // pred_check_branch
          %322 = sbr.rel (%p320) target = $region36
        $region35: #{tpu_custom_call.1} parent=11 // pred_region
          %s324 = ssub.s32 512, 512
          %325 = vsyncadd [#allocation9], %s324
          %s326 = smul.addr %s28, 4
          %s327 = smul.addr %s326, 128
          %s328 = scalar_lea.hbm %s5, %s327
          %s329 = sshll.u32 [#allocation10], 4
          %s330 = int_to_ptr.vmem [resolvable:$true] %s329
          %335 = dma.hbm_to_vmem [thread:$0]  %s328, 512, %s330, [#allocation9], 128, 128, 8
        $region36: #{tpu_custom_call.1} parent=11 // pred_fallthru
          _
        // Predicated region
        $region37: #{tpu_custom_call.1} parent=11 // pred_check
          %p336 = pneg %p213
        $region38: #{tpu_custom_call.1} parent=11 // pred_check_branch
          %338 = sbr.rel (%p336) target = $region40
        $region39: #{tpu_custom_call.1} parent=11 // pred_region
          %p339 = scmp.lt.s32.totalorder %s28, 4
          %s340 = scalar_select %p339, %s28, 4
          %s341 = scalar_lea.vmem %s6, %s340
        $region40: #{tpu_custom_call.1} parent=11 // pred_fallthru
          _
      $region12: #{tpu_custom_call.1} parent=5 // pred_fallthru
        _
      %p342 = scmp.lt.s32.totalorder %s19, 5
      // Predicated region
      $region41: #{tpu_custom_call.1} parent=5 // pred_check
        %p343 = pneg %p342
      $region42: #{tpu_custom_call.1} parent=5 // pred_check_branch
        %345 = sbr.rel (%p343) target = $region44
      $region43: #{tpu_custom_call.1} parent=5 // pred_region
        _
      $region44: #{tpu_custom_call.1} parent=5 // pred_fallthru
        _
      %p346 = scmp.le.s32.totalorder 1, %s19
      %p347 = scmp.lt.s32.totalorder %s19, 6
      %p348 = pnand %p346, %p347
      %p349 = pneg %p348
      // Predicated region
      $region45: #{tpu_custom_call.1} parent=5 // pred_check
        _
      $region46: #{tpu_custom_call.1} parent=5 // pred_check_branch
        %351 = sbr.rel (%p348) target = $region48
      $region47: #{tpu_custom_call.1} parent=5 // pred_region
        %s352 = ssub.s32 %s19, 1
        // Predicated region
        $region49: #{tpu_custom_call.1} parent=47 // pred_check
          %p353 = pneg %p57
        $region50: #{tpu_custom_call.1} parent=47 // pred_check_branch
          %355 = sbr.rel (%p353) target = $region52
        $region51: #{tpu_custom_call.1} parent=47 // pred_region
          %356 = dma.done [#allocation3], 128
        $region52: #{tpu_custom_call.1} parent=47 // pred_fallthru
          _
        // Predicated region
        $region53: #{tpu_custom_call.1} parent=47 // pred_check
          %p357 = pneg %p83
        $region54: #{tpu_custom_call.1} parent=47 // pred_check_branch
          %359 = sbr.rel (%p357) target = $region56
        $region55: #{tpu_custom_call.1} parent=47 // pred_region
          %360 = dma.done [#allocation6], 384
        $region56: #{tpu_custom_call.1} parent=47 // pred_fallthru
          _
        // Predicated region
        $region57: #{tpu_custom_call.1} parent=47 // pred_check
          %p361 = pneg %p109
        $region58: #{tpu_custom_call.1} parent=47 // pred_check_branch
          %363 = sbr.rel (%p361) target = $region60
        $region59: #{tpu_custom_call.1} parent=47 // pred_region
          %364 = dma.done [#allocation6], 16
        $region60: #{tpu_custom_call.1} parent=47 // pred_fallthru
          _
        // Predicated region
        $region61: #{tpu_custom_call.1} parent=47 // pred_check
          %p365 = pneg %p135
        $region62: #{tpu_custom_call.1} parent=47 // pred_check_branch
          %367 = sbr.rel (%p365) target = $region64
        $region63: #{tpu_custom_call.1} parent=47 // pred_region
          %368 = dma.done [#allocation9], 512
        $region64: #{tpu_custom_call.1} parent=47 // pred_fallthru
          _
        // Predicated region
        $region65: #{tpu_custom_call.1} parent=47 // pred_check
          %p369 = pneg %p187
        $region66: #{tpu_custom_call.1} parent=47 // pred_check_branch
          %371 = sbr.rel (%p369) target = $region68
        $region67: #{tpu_custom_call.1} parent=47 // pred_region
          %372 = dma.done [#allocation9], 512
        $region68: #{tpu_custom_call.1} parent=47 // pred_fallthru
          _
        %p373 = pneg %p57
        %p374 = pneg %p54
        %p375 = pneg %p83
        %p376 = pneg %p80
        %p377 = pneg %p109
        %p378 = pneg %p106
        %p379 = pneg %p135
        %p380 = pneg %p132
        %p381 = scmp.lt.s32.totalorder %s28, 4
        %s382 = scalar_select %p381, %s28, 4
        %s383 = scalar_lea.vmem %s4, %s382
        %p384 = pneg %p161
        %p385 = pneg %p158
        %p386 = pneg %p187
        %p387 = pneg %p184
        %p388 = scmp.lt.s32.totalorder %s28, 4
        %s389 = scalar_select %p388, %s28, 4
        %s390 = scalar_lea.vmem %s6, %s389
        %p391 = pneg %p213
        %p392 = pneg %p210
        %p393 = pneg %p241
        %p394 = pneg %p238
        %s395 = sand.u32 %s228, 1
        %s396 = scalar_lea.sflag [#allocation4], %s395
        %s397 = sand.u32 %s228, 1
        %s398 = smul.addr %s397, 8
        %s399 = scalar_lea.vmem [#allocation11], %s398
        %p400 = scmp.lt.s32.totalorder %s28, 4
        %s401 = scalar_select %p400, %s28, 4
        %s402 = scalar_lea.vmem %s4, %s401
        %p403 = scmp.lt.s32.totalorder %s28, 4
        %s404 = scalar_select %p403, %s28, 4
        %s405 = scalar_lea.vmem %s6, %s404
        %v406 = vld [vmem:[#allocation2] sm:$0xff]
        %v407 = vld [vmem:[#allocation5] sm:$0xff]
        %v408 = vld [vmem:[#allocation5 + $0x8] sm:$0xff]
        %v409 = vld [vmem:[#allocation5 + $0x10] sm:$0xff]
        %v410 = vld [vmem:[#allocation7] sm:$0x1]
        %v412 = vlaneseq
        %v413 = vshrl.u32 %v412, 7
        %v414 = vsub.s32 0, %v413
        %v415 = vrot.slane %v410, %v414
        %vm417 = vcmask 195584
        %v419 = vsel %vm417, %v406, 0
        %421 = vmatprep.subr.mxu0 0.0
        %422 = vmatpush1.msra.mxu0 0.0
        %423 = vmatprep.subr.mxu0 0.0
        %424 = vmatpush1.msra.mxu0 0.0
        %425 = vmatprep.subr.mxu0 0.0
        %426 = vmatpush1.msra.mxu0 0.0
        %427 = vmatprep.subr.mxu0 0.0
        %428 = vmatpush1.msra.mxu0 0.0
        %429 = vmatprep.subr.mxu0 0.0
        %430 = vmatpush1.msra.mxu0 0.0
        %431 = vmatprep.subr.mxu0 0.0
        %432 = vmatpush1.msra.mxu0 0.0
        %433 = vmatprep.subr.mxu0 0.0
        %434 = vmatpush1.msra.mxu0 0.0
        %435 = vmatprep.subr.mxu0 0.0
        %436 = vmatpush1.msra.mxu0 0.0
        %437 = vmatprep.subr.mxu0 0.0
        %438 = vmatpush1.msra.mxu0 0.0
        %439 = vmatprep.subr.mxu0 0.0
        %440 = vmatpush1.msra.mxu0 0.0
        %441 = vmatprep.subr.mxu0 0.0
        %442 = vmatpush1.msra.mxu0 0.0
        %443 = vmatprep.subr.mxu0 0.0
        %444 = vmatpush1.msra.mxu0 0.0
        %445 = vmatprep.subr.mxu0 0.0
        %446 = vmatpush1.msra.mxu0 0.0
        %447 = vmatprep.subr.mxu0 0.0
        %448 = vmatpush1.msra.mxu0 %v409
        %449 = vmatprep.subr.mxu0 0.0
        %450 = vmatpush1.msra.mxu0 %v408
        %451 = vmatprep.subr.mxu0 0.0
        %452 = vmatpush1.msra.mxu0 %v407
        %453 = vmatprep.subr.mxu0 0.0
        %454 = vmatpush2.msra.mxu0 0.0
        %455 = vmatprep.subr.mxu0 0.0
        %456 = vmatpush2.msra.mxu0 0.0
        %457 = vmatprep.subr.mxu0 0.0
        %458 = vmatpush2.msra.mxu0 0.0
        %459 = vmatprep.subr.mxu0 0.0
        %460 = vmatpush2.msra.mxu0 0.0
        %461 = vmatprep.subr.mxu0 0.0
        %462 = vmatpush2.msra.mxu0 0.0
        %463 = vmatprep.subr.mxu0 0.0
        %464 = vmatpush2.msra.mxu0 0.0
        %465 = vmatprep.subr.mxu0 0.0
        %466 = vmatpush2.msra.mxu0 0.0
        %467 = vmatprep.subr.mxu0 0.0
        %468 = vmatpush2.msra.mxu0 0.0
        %469 = vmatprep.subr.mxu0 0.0
        %470 = vmatpush2.msra.mxu0 0.0
        %471 = vmatprep.subr.mxu0 0.0
        %472 = vmatpush2.msra.mxu0 0.0
        %473 = vmatprep.subr.mxu0 0.0
        %474 = vmatpush2.msra.mxu0 0.0
        %475 = vmatprep.subr.mxu0 0.0
        %476 = vmatpush2.msra.mxu0 0.0
        %477 = vmatprep.subr.mxu0 0.0
        %478 = vmatpush2.msra.mxu0 0.0
        %479 = vmatprep.subr.mxu0 0.0
        %480 = vmatpush2.msra.mxu0 0.0
        %481 = vmatprep.subr.mxu0 0.0
        %482 = vmatpush2.msra.mxu0 0.0
        %483 = vmatprep.subr.mxu0 0.0
        %484 = vmatpush2.msra.mxu0 0.0
        %485 = vmatprep.mubr.f32.mxu0 0.0
        %486 = vmatmul.mubr.f32.gmra.mxu0 %v419
        %v487 = vpop.f32.mrf.mxu0
        %v488 = vadd.f32 %v415, %v487
        %v489 = vpop.f32.mrf.mxu0
        %490 = vdwg.mxu0
        %vm491 = vcmp.gt.f32.partialorder %v488, 0.0
        %v492 = vmul.f32 %v488, 0.01
        %v493 = vsel %vm491, %v488, %v492
        %v494 = vld [vmem:[#allocation8] sm:$0xff]
        %v495 = vld [vmem:[#allocation8 + $0x8] sm:$0xff]
        %v496 = vld [vmem:[#allocation8 + $0x10] sm:$0xff]
        %v497 = vld [vmem:[#allocation8 + $0x18] sm:$0xff]
        %v498 = vld [vmem:[%s402] sm:$0x1]
        %v500 = vlaneseq
        %v501 = vshrl.u32 %v500, 7
        %v502 = vsub.s32 0, %v501
        %v503 = vrot.slane %v498, %v502
        %vm505 = vcmask 261120
        %v507 = vsel %vm505, %v493, 0
        %509 = vmatprep.subr.mxu0 0.0
        %510 = vmatpush1.msra.mxu0 0.0
        %511 = vmatprep.subr.mxu0 0.0
        %512 = vmatpush1.msra.mxu0 0.0
        %513 = vmatprep.subr.mxu0 0.0
        %514 = vmatpush1.msra.mxu0 0.0
        %515 = vmatprep.subr.mxu0 0.0
        %516 = vmatpush1.msra.mxu0 0.0
        %517 = vmatprep.subr.mxu0 0.0
        %518 = vmatpush1.msra.mxu0 0.0
        %519 = vmatprep.subr.mxu0 0.0
        %520 = vmatpush1.msra.mxu0 0.0
        %521 = vmatprep.subr.mxu0 0.0
        %522 = vmatpush1.msra.mxu0 0.0
        %523 = vmatprep.subr.mxu0 0.0
        %524 = vmatpush1.msra.mxu0 0.0
        %525 = vmatprep.subr.mxu0 0.0
        %526 = vmatpush1.msra.mxu0 0.0
        %527 = vmatprep.subr.mxu0 0.0
        %528 = vmatpush1.msra.mxu0 0.0
        %529 = vmatprep.subr.mxu0 0.0
        %530 = vmatpush1.msra.mxu0 0.0
        %531 = vmatprep.subr.mxu0 0.0
        %532 = vmatpush1.msra.mxu0 0.0
        %533 = vmatprep.subr.mxu0 0.0
        %534 = vmatpush1.msra.mxu0 %v497
        %535 = vmatprep.subr.mxu0 0.0
        %536 = vmatpush1.msra.mxu0 %v496
        %537 = vmatprep.subr.mxu0 0.0
        %538 = vmatpush1.msra.mxu0 %v495
        %539 = vmatprep.subr.mxu0 0.0
        %540 = vmatpush1.msra.mxu0 %v494
        %541 = vmatprep.subr.mxu0 0.0
        %542 = vmatpush2.msra.mxu0 0.0
        %543 = vmatprep.subr.mxu0 0.0
        %544 = vmatpush2.msra.mxu0 0.0
        %545 = vmatprep.subr.mxu0 0.0
        %546 = vmatpush2.msra.mxu0 0.0
        %547 = vmatprep.subr.mxu0 0.0
        %548 = vmatpush2.msra.mxu0 0.0
        %549 = vmatprep.subr.mxu0 0.0
        %550 = vmatpush2.msra.mxu0 0.0
        %551 = vmatprep.subr.mxu0 0.0
        %552 = vmatpush2.msra.mxu0 0.0
        %553 = vmatprep.subr.mxu0 0.0
        %554 = vmatpush2.msra.mxu0 0.0
        %555 = vmatprep.subr.mxu0 0.0
        %556 = vmatpush2.msra.mxu0 0.0
        %557 = vmatprep.subr.mxu0 0.0
        %558 = vmatpush2.msra.mxu0 0.0
        %559 = vmatprep.subr.mxu0 0.0
        %560 = vmatpush2.msra.mxu0 0.0
        %561 = vmatprep.subr.mxu0 0.0
        %562 = vmatpush2.msra.mxu0 0.0
        %563 = vmatprep.subr.mxu0 0.0
        %564 = vmatpush2.msra.mxu0 0.0
        %565 = vmatprep.subr.mxu0 0.0
        %566 = vmatpush2.msra.mxu0 0.0
        %567 = vmatprep.subr.mxu0 0.0
        %568 = vmatpush2.msra.mxu0 0.0
        %569 = vmatprep.subr.mxu0 0.0
        %570 = vmatpush2.msra.mxu0 0.0
        %571 = vmatprep.subr.mxu0 0.0
        %572 = vmatpush2.msra.mxu0 0.0
        %573 = vmatprep.mubr.f32.mxu0 0.0
        %574 = vmatmul.mubr.f32.gmra.mxu0 %v507
        %v575 = vpop.f32.mrf.mxu0
        %v576 = vadd.f32 %v503, %v575
        %v577 = vpop.f32.mrf.mxu0
        %578 = vdwg.mxu0
        %vm579 = vcmp.gt.f32.partialorder %v576, 0.0
        %v580 = vmul.f32 %v576, 0.01
        %v581 = vsel %vm579, %v576, %v580
        %v582 = vld [vmem:[#allocation10] sm:$0xff]
        %v583 = vld [vmem:[#allocation10 + $0x8] sm:$0xff]
        %v584 = vld [vmem:[#allocation10 + $0x10] sm:$0xff]
        %v585 = vld [vmem:[#allocation10 + $0x18] sm:$0xff]
        %v586 = vld [vmem:[%s405] sm:$0x1]
        %v588 = vlaneseq
        %v589 = vshrl.u32 %v588, 7
        %v590 = vsub.s32 0, %v589
        %v591 = vrot.slane %v586, %v590
        %v594 = vsel %vm505, %v581, 0
        %596 = vmatprep.subr.mxu0 0.0
        %597 = vmatpush1.msra.mxu0 0.0
        %598 = vmatprep.subr.mxu0 0.0
        %599 = vmatpush1.msra.mxu0 0.0
        %600 = vmatprep.subr.mxu0 0.0
        %601 = vmatpush1.msra.mxu0 0.0
        %602 = vmatprep.subr.mxu0 0.0
        %603 = vmatpush1.msra.mxu0 0.0
        %604 = vmatprep.subr.mxu0 0.0
        %605 = vmatpush1.msra.mxu0 0.0
        %606 = vmatprep.subr.mxu0 0.0
        %607 = vmatpush1.msra.mxu0 0.0
        %608 = vmatprep.subr.mxu0 0.0
        %609 = vmatpush1.msra.mxu0 0.0
        %610 = vmatprep.subr.mxu0 0.0
        %611 = vmatpush1.msra.mxu0 0.0
        %612 = vmatprep.subr.mxu0 0.0
        %613 = vmatpush1.msra.mxu0 0.0
        %614 = vmatprep.subr.mxu0 0.0
        %615 = vmatpush1.msra.mxu0 0.0
        %616 = vmatprep.subr.mxu0 0.0
        %617 = vmatpush1.msra.mxu0 0.0
        %618 = vmatprep.subr.mxu0 0.0
        %619 = vmatpush1.msra.mxu0 0.0
        %620 = vmatprep.subr.mxu0 0.0
        %621 = vmatpush1.msra.mxu0 %v585
        %622 = vmatprep.subr.mxu0 0.0
        %623 = vmatpush1.msra.mxu0 %v584
        %624 = vmatprep.subr.mxu0 0.0
        %625 = vmatpush1.msra.mxu0 %v583
        %626 = vmatprep.subr.mxu0 0.0
        %627 = vmatpush1.msra.mxu0 %v582
        %628 = vmatprep.subr.mxu0 0.0
        %629 = vmatpush2.msra.mxu0 0.0
        %630 = vmatprep.subr.mxu0 0.0
        %631 = vmatpush2.msra.mxu0 0.0
        %632 = vmatprep.subr.mxu0 0.0
        %633 = vmatpush2.msra.mxu0 0.0
        %634 = vmatprep.subr.mxu0 0.0
        %635 = vmatpush2.msra.mxu0 0.0
        %636 = vmatprep.subr.mxu0 0.0
        %637 = vmatpush2.msra.mxu0 0.0
        %638 = vmatprep.subr.mxu0 0.0
        %639 = vmatpush2.msra.mxu0 0.0
        %640 = vmatprep.subr.mxu0 0.0
        %641 = vmatpush2.msra.mxu0 0.0
        %642 = vmatprep.subr.mxu0 0.0
        %643 = vmatpush2.msra.mxu0 0.0
        %644 = vmatprep.subr.mxu0 0.0
        %645 = vmatpush2.msra.mxu0 0.0
        %646 = vmatprep.subr.mxu0 0.0
        %647 = vmatpush2.msra.mxu0 0.0
        %648 = vmatprep.subr.mxu0 0.0
        %649 = vmatpush2.msra.mxu0 0.0
        %650 = vmatprep.subr.mxu0 0.0
        %651 = vmatpush2.msra.mxu0 0.0
        %652 = vmatprep.subr.mxu0 0.0
        %653 = vmatpush2.msra.mxu0 0.0
        %654 = vmatprep.subr.mxu0 0.0
        %655 = vmatpush2.msra.mxu0 0.0
        %656 = vmatprep.subr.mxu0 0.0
        %657 = vmatpush2.msra.mxu0 0.0
        %658 = vmatprep.subr.mxu0 0.0
        %659 = vmatpush2.msra.mxu0 0.0
        %660 = vmatprep.mubr.f32.mxu0 0.0
        %661 = vmatmul.mubr.f32.gmra.mxu0 %v594
        %v662 = vpop.f32.mrf.mxu0
        %v663 = vadd.f32 %v591, %v662
        %v664 = vpop.f32.mrf.mxu0
        %665 = vdwg.mxu0
        %vm666 = vcmp.gt.f32.partialorder %v663, 0.0
        %v667 = vmul.f32 %v663, 0.01
        %v668 = vsel %vm666, %v663, %v667
        %669 = vst [vmem:[%s399] sm:$0xff] %v668
        %s670 = sand.u32 %s228, 1
        %s671 = scalar_lea.sflag [#allocation4], %s670
        %s672 = sand.u32 %s228, 1
        %s673 = smul.addr %s672, 8
        %s674 = scalar_lea.vmem [#allocation11], %s673
        // Predicated region
        $region69: #{tpu_custom_call.1} parent=47 // pred_check
          %p675 = pneg %p238
        $region70: #{tpu_custom_call.1} parent=47 // pred_check_branch
          %677 = sbr.rel (%p675) target = $region72
        $region71: #{tpu_custom_call.1} parent=47 // pred_region
          %s679 = ssub.s32 128, 128
          %680 = vsyncadd %s671, %s679
          %s681 = sadd.s32 %s29, %s28
          %s682 = smul.addr %s681, 128
          %s683 = scalar_lea.hbm %s7, %s682
          %s685 = sshll.u32 %s674, 4
          %s686 = int_to_ptr.vmem [resolvable:$true] %s685
          %688 = dma.vmem_to_hbm [thread:$0]  %s686, 128, %s683, %s671
        $region72: #{tpu_custom_call.1} parent=47 // pred_fallthru
          _
      $region48: #{tpu_custom_call.1} parent=5 // pred_fallthru
        _
      %p689 = scmp.le.s32.totalorder 2, %s19
      // Predicated region
      $region73: #{tpu_custom_call.1} parent=5 // pred_check
        %p690 = pneg %p689
      $region74: #{tpu_custom_call.1} parent=5 // pred_check_branch
        %692 = sbr.rel (%p690) target = $region76
      $region75: #{tpu_custom_call.1} parent=5 // pred_region
        %s693 = ssub.s32 %s19, 2
        // Predicated region
        $region77: #{tpu_custom_call.1} parent=75 // pred_check
          %p694 = pneg %p244
        $region78: #{tpu_custom_call.1} parent=75 // pred_check_branch
          %696 = sbr.rel (%p694) target = $region80
        $region79: #{tpu_custom_call.1} parent=75 // pred_region
          %s697 = sand.u32 %s229, 1
          %s698 = scalar_lea.sflag [#allocation4], %s697
          %s699 = sand.u32 %s229, 1
          %s700 = smul.addr %s699, 8
          %s701 = scalar_lea.vmem [#allocation11], %s700
          %702 = dma.done %s698, 128
        $region80: #{tpu_custom_call.1} parent=75 // pred_fallthru
          _
      $region76: #{tpu_custom_call.1} parent=5 // pred_fallthru
        _
    $region6: #{tpu_custom_call.1} parent=1 // loop_footer
      %s23 = sadd.s32 1, %s19
    $region7: #{tpu_custom_call.1} parent=1 // loop_footer_branch
      %18 = sbr.rel target = $region3
    $region8: #{tpu_custom_call.1} parent=1 // loop_exit
      _
    %703 = vsyncpa [#allocation3], 1
    %s704 = scalar_lea.sflag [#allocation3], 1
    %705 = vsyncpa %s704, 1
    %706 = vsyncpa [#allocation6], 1
    %707 = vsyncpa [#allocation9], 1
    %708 = vsyncpa [#allocation4], 1
    %s709 = scalar_lea.sflag [#allocation4], 1
    %710 = vsyncpa %s709, 1

// kernel: tpu_custom_call.1
$region0: #{tpu_custom_call.1}
  #allocation0 [shape = 'u32[]', space=smem, size = 0x4, offset = 0x4, fixed_abs, tag = 'smem constant byte address 0x4 - core index']
  #allocation1 [shape = 'u32[144,128]{1,0:T(1,128)}', space=vmem, size = 0x12000, scoped, tag = 'internal scratch']
  %s0 = inlined_call_operand.hbm [shape: f32[8,24], index: 0, kind: input, shape index: {}]
  %s1 = inlined_call_operand.hbm [shape: f32[5,24,32], index: 1, kind: input, shape index: {}]
  %s2 = inlined_call_operand.hbm [shape: f32[5,1,32], index: 2, kind: input, shape index: {}]
  %s3 = inlined_call_operand.hbm [shape: f32[5,32,32], index: 3, kind: input, shape index: {}]
  %s4 = inlined_call_operand.vmem [shape: f32[5,1,32], index: 4, kind: input, shape index: {}]
  %s5 = inlined_call_operand.hbm [shape: f32[5,32,128], index: 5, kind: input, shape index: {}]
  %s6 = inlined_call_operand.vmem [shape: f32[5,1,128], index: 6, kind: input, shape index: {}]
  %s7 = inlined_call_operand.hbm [shape: f32[5,8,128], index: 7, kind: output, shape index: {}]
  %s8 = sld [smem:[#allocation0]]
  $region81: #{tpu_custom_call.1} parent=0
    _
  %s10 = ssub.s32 1, %s8
  %s11 = scalar_select 0, %s10, %s8
  $region1: #{tpu_custom_call.1} parent=0
    #allocation2 [shape = 'u8[4096]{0}', space=vmem, size = 0x1000, scoped, tag = 'input window, operand 0, single buffered']
    #allocation3 [shape = 's32[2]{0}', space=sflag, size = 0x8, scoped, tag = 'scoped memory for tpu_custom_call.1']
    #allocation4 [shape = 's32[2]{0}', space=sflag, size = 0x8, scoped, tag = 'scoped memory for tpu_custom_call.1']
    #allocation5 [shape = 'u8[24576]{0}', space=vmem, size = 0x6000, scoped, tag = 'input window, operand 1']
    #allocation6 [shape = 's32[2]{0}', space=sflag, size = 0x8, scoped, tag = 'scoped memory for tpu_custom_call.1']
    #allocation7 [shape = 'u8[1024]{0}', space=vmem, size = 0x400, scoped, tag = 'input window, operand 2']
    #allocation8 [shape = 'u8[32768]{0}', space=vmem, size = 0x8000, scoped, tag = 'input window, operand 3']
    #allocation9 [shape = 's32[2]{0}', space=sflag, size = 0x8, scoped, tag = 'scoped memory for tpu_custom_call.1']
    #allocation10 [shape = 'u8[32768]{0}', space=vmem, size = 0x8000, scoped, tag = 'input window, operand 5']
    #allocation11 [shape = 'u8[8192]{0}', space=vmem, size = 0x2000, scoped, tag = 'output window, operand 0']
    %12 = vsyncpa [#allocation3], 0
    %13 = vsyncpa [#allocation6], 0
    %s14 = scalar_lea.sflag [#allocation6], 1
    %15 = vsyncpa %s14, 0
    %16 = vsyncpa [#allocation9], 0
    %s17 = scalar_lea.sflag [#allocation9], 1
    %18 = vsyncpa %s17, 0
    %19 = vsyncpa [#allocation4], 0
    %s20 = scalar_lea.sflag [#allocation4], 1
    %21 = vsyncpa %s20, 0
    loop: start=0, step=1, limit=7
    $region2: #{tpu_custom_call.1} parent=1 // loop_pre_header
      _
    $region3: #{tpu_custom_call.1} parent=1 // loop_header
      %s23 = sphi 0, %s27
      %p24 = scmp.ge.s32.totalorder %s23, 7
      %s30 = sphi 0, %s42
      %s31 = sphi 0, %s38
      %s32 = sphi 0, %s30
      %s33 = sphi 0, %s31
      %s34 = sphi 0, %s32
      %s35 = sphi 0, %s33
      %s45 = sphi 0, %s47
      %s48 = sphi 0, %s45
      %s49 = sphi 0, %s48
      %s65 = sphi 0, %s49
      %s71 = sphi 0, %s73
      %s74 = sphi 0, %s71
      %s75 = sphi 0, %s74
      %s91 = sphi 0, %s75
      %s97 = sphi 0, %s99
      %s100 = sphi 0, %s97
      %s101 = sphi 0, %s100
      %s117 = sphi 0, %s101
      %s123 = sphi 0, %s125
      %s126 = sphi 0, %s123
      %s127 = sphi 0, %s126
      %s143 = sphi 0, %s127
      %s149 = sphi 0, %s151
      %s152 = sphi 0, %s149
      %s153 = sphi 0, %s152
      %s169 = sphi 0, %s153
      %s175 = sphi 0, %s177
      %s178 = sphi 0, %s175
      %s179 = sphi 0, %s178
      %s195 = sphi 0, %s179
      %s201 = sphi 0, %s203
      %s204 = sphi 0, %s201
      %s205 = sphi 0, %s204
      %s221 = sphi 0, %s205
      %s229 = sphi 0, %s231
      %s232 = sphi 0, %s229
      %s233 = sphi 0, %s232
      %s249 = sphi 0, %s233
    $region4: #{tpu_custom_call.1} parent=1 // loop_header_branch
      %26 = sbr.rel (%p24) target = $region8
    $region5: #{tpu_custom_call.1} parent=1 // loop_body
      %s28 = ssub.s32 %s23, 1
      %s29 = ssub.s32 %s23, 2
      %s36 = sadd.s32 1, %s31
      %p37 = scmp.ge.s32.totalorder %s36, 1
      %s38 = scalar_select %p37, 0, %s36
      %s39 = sadd.s32 1, %s30
      %s40 = scalar_select %p37, %s39, %s30
      %p41 = scmp.ge.s32.totalorder %s40, 5
      %s42 = scalar_select %p41, 0, %s40
      %s43 = ssub.s32 %s31, %s38
      %p44 = scmp.eq.s32.totalorder %s43, 0
      %s46 = sadd.s32 %s45, 1
      %s47 = scalar_select %p44, %s45, %s46
      %p50 = pneg %p44
      %p51 = scmp.eq.s32.totalorder %s23, 4
      %p52 = por %p50, %p51
      %p53 = scmp.ne.s32.totalorder %s45, %s48
      %p54 = scmp.eq.s32.totalorder %s23, 0
      %p55 = por %p53, %p54
      %p56 = scmp.ne.s32.totalorder %s45, %s48
      %p57 = scmp.eq.s32.totalorder %s28, 4
      %p58 = por %p56, %p57
      %p59 = scmp.ne.s32.totalorder %s48, %s49
      %p60 = scmp.eq.s32.totalorder %s28, 0
      %p61 = por %p59, %p60
      %p62 = scmp.ne.s32.totalorder %s48, %s49
      %p63 = scmp.eq.s32.totalorder %s29, 4
      %p64 = por %p62, %p63
      %p66 = scmp.ne.s32.totalorder %s49, %s65
      %p67 = scmp.eq.s32.totalorder %s29, 0
      %p68 = por %p66, %p67
      %s69 = ssub.s32 %s30, %s42
      %p70 = scmp.eq.s32.totalorder %s69, 0
      %s72 = sadd.s32 %s71, 1
      %s73 = scalar_select %p70, %s71, %s72
      %p76 = pneg %p70
      %p77 = scmp.eq.s32.totalorder %s23, 4
      %p78 = por %p76, %p77
      %p79 = scmp.ne.s32.totalorder %s71, %s74
      %p80 = scmp.eq.s32.totalorder %s23, 0
      %p81 = por %p79, %p80
      %p82 = scmp.ne.s32.totalorder %s71, %s74
      %p83 = scmp.eq.s32.totalorder %s28, 4
      %p84 = por %p82, %p83
      %p85 = scmp.ne.s32.totalorder %s74, %s75
      %p86 = scmp.eq.s32.totalorder %s28, 0
      %p87 = por %p85, %p86
      %p88 = scmp.ne.s32.totalorder %s74, %s75
      %p89 = scmp.eq.s32.totalorder %s29, 4
      %p90 = por %p88, %p89
      %p92 = scmp.ne.s32.totalorder %s75, %s91
      %p93 = scmp.eq.s32.totalorder %s29, 0
      %p94 = por %p92, %p93
      %s95 = ssub.s32 %s30, %s42
      %p96 = scmp.eq.s32.totalorder %s95, 0
      %s98 = sadd.s32 %s97, 1
      %s99 = scalar_select %p96, %s97, %s98
      %p102 = pneg %p96
      %p103 = scmp.eq.s32.totalorder %s23, 4
      %p104 = por %p102, %p103
      %p105 = scmp.ne.s32.totalorder %s97, %s100
      %p106 = scmp.eq.s32.totalorder %s23, 0
      %p107 = por %p105, %p106
      %p108 = scmp.ne.s32.totalorder %s97, %s100
      %p109 = scmp.eq.s32.totalorder %s28, 4
      %p110 = por %p108, %p109
      %p111 = scmp.ne.s32.totalorder %s100, %s101
      %p112 = scmp.eq.s32.totalorder %s28, 0
      %p113 = por %p111, %p112
      %p114 = scmp.ne.s32.totalorder %s100, %s101
      %p115 = scmp.eq.s32.totalorder %s29, 4
      %p116 = por %p114, %p115
      %p118 = scmp.ne.s32.totalorder %s101, %s117
      %p119 = scmp.eq.s32.totalorder %s29, 0
      %p120 = por %p118, %p119
      %s121 = ssub.s32 %s30, %s42
      %p122 = scmp.eq.s32.totalorder %s121, 0
      %s124 = sadd.s32 %s123, 1
      %s125 = scalar_select %p122, %s123, %s124
      %p128 = pneg %p122
      %p129 = scmp.eq.s32.totalorder %s23, 4
      %p130 = por %p128, %p129
      %p131 = scmp.ne.s32.totalorder %s123, %s126
      %p132 = scmp.eq.s32.totalorder %s23, 0
      %p133 = por %p131, %p132
      %p134 = scmp.ne.s32.totalorder %s123, %s126
      %p135 = scmp.eq.s32.totalorder %s28, 4
      %p136 = por %p134, %p135
      %p137 = scmp.ne.s32.totalorder %s126, %s127
      %p138 = scmp.eq.s32.totalorder %s28, 0
      %p139 = por %p137, %p138
      %p140 = scmp.ne.s32.totalorder %s126, %s127
      %p141 = scmp.eq.s32.totalorder %s29, 4
      %p142 = por %p140, %p141
      %p144 = scmp.ne.s32.totalorder %s127, %s143
      %p145 = scmp.eq.s32.totalorder %s29, 0
      %p146 = por %p144, %p145
      %s147 = ssub.s32 %s30, %s42
      %p148 = scmp.eq.s32.totalorder %s147, 0
      %s150 = sadd.s32 %s149, 1
      %s151 = scalar_select %p148, %s149, %s150
      %p154 = pneg %p148
      %p155 = scmp.eq.s32.totalorder %s23, 4
      %p156 = por %p154, %p155
      %p157 = scmp.ne.s32.totalorder %s149, %s152
      %p158 = scmp.eq.s32.totalorder %s23, 0
      %p159 = por %p157, %p158
      %p160 = scmp.ne.s32.totalorder %s149, %s152
      %p161 = scmp.eq.s32.totalorder %s28, 4
      %p162 = por %p160, %p161
      %p163 = scmp.ne.s32.totalorder %s152, %s153
      %p164 = scmp.eq.s32.totalorder %s28, 0
      %p165 = por %p163, %p164
      %p166 = scmp.ne.s32.totalorder %s152, %s153
      %p167 = scmp.eq.s32.totalorder %s29, 4
      %p168 = por %p166, %p167
      %p170 = scmp.ne.s32.totalorder %s153, %s169
      %p171 = scmp.eq.s32.totalorder %s29, 0
      %p172 = por %p170, %p171
      %s173 = ssub.s32 %s30, %s42
      %p174 = scmp.eq.s32.totalorder %s173, 0
      %s176 = sadd.s32 %s175, 1
      %s177 = scalar_select %p174, %s175, %s176
      %p180 = pneg %p174
      %p181 = scmp.eq.s32.totalorder %s23, 4
      %p182 = por %p180, %p181
      %p183 = scmp.ne.s32.totalorder %s175, %s178
      %p184 = scmp.eq.s32.totalorder %s23, 0
      %p185 = por %p183, %p184
      %p186 = scmp.ne.s32.totalorder %s175, %s178
      %p187 = scmp.eq.s32.totalorder %s28, 4
      %p188 = por %p186, %p187
      %p189 = scmp.ne.s32.totalorder %s178, %s179
      %p190 = scmp.eq.s32.totalorder %s28, 0
      %p191 = por %p189, %p190
      %p192 = scmp.ne.s32.totalorder %s178, %s179
      %p193 = scmp.eq.s32.totalorder %s29, 4
      %p194 = por %p192, %p193
      %p196 = scmp.ne.s32.totalorder %s179, %s195
      %p197 = scmp.eq.s32.totalorder %s29, 0
      %p198 = por %p196, %p197
      %s199 = ssub.s32 %s30, %s42
      %p200 = scmp.eq.s32.totalorder %s199, 0
      %s202 = sadd.s32 %s201, 1
      %s203 = scalar_select %p200, %s201, %s202
      %p206 = pneg %p200
      %p207 = scmp.eq.s32.totalorder %s23, 4
      %p208 = por %p206, %p207
      %p209 = scmp.ne.s32.totalorder %s201, %s204
      %p210 = scmp.eq.s32.totalorder %s23, 0
      %p211 = por %p209, %p210
      %p212 = scmp.ne.s32.totalorder %s201, %s204
      %p213 = scmp.eq.s32.totalorder %s28, 4
      %p214 = por %p212, %p213
      %p215 = scmp.ne.s32.totalorder %s204, %s205
      %p216 = scmp.eq.s32.totalorder %s28, 0
      %p217 = por %p215, %p216
      %p218 = scmp.ne.s32.totalorder %s204, %s205
      %p219 = scmp.eq.s32.totalorder %s29, 4
      %p220 = por %p218, %p219
      %p222 = scmp.ne.s32.totalorder %s205, %s221
      %p223 = scmp.eq.s32.totalorder %s29, 0
      %p224 = por %p222, %p223
      %s225 = ssub.s32 %s30, %s42
      %s226 = ssub.s32 %s31, %s38
      %s227 = sor.u32 %s225, %s226
      %p228 = scmp.eq.s32.totalorder %s227, 0
      %s230 = sadd.s32 %s229, 1
      %s231 = scalar_select %p228, %s229, %s230
      %p234 = pneg %p228
      %p235 = scmp.eq.s32.totalorder %s23, 4
      %p236 = por %p234, %p235
      %p237 = scmp.ne.s32.totalorder %s229, %s232
      %p238 = scmp.eq.s32.totalorder %s23, 0
      %p239 = por %p237, %p238
      %p240 = scmp.ne.s32.totalorder %s229, %s232
      %p241 = scmp.eq.s32.totalorder %s28, 4
      %p242 = por %p240, %p241
      %p243 = scmp.ne.s32.totalorder %s232, %s233
      %p244 = scmp.eq.s32.totalorder %s28, 0
      %p245 = por %p243, %p244
      %p246 = scmp.ne.s32.totalorder %s232, %s233
      %p247 = scmp.eq.s32.totalorder %s29, 4
      %p248 = por %p246, %p247
      %p250 = scmp.ne.s32.totalorder %s233, %s249
      %p251 = scmp.eq.s32.totalorder %s29, 0
      %p252 = por %p250, %p251
      %p253 = scmp.le.s32.totalorder 1, %s23
      %p254 = scmp.lt.s32.totalorder %s23, 6
      %p255 = pnand %p253, %p254
      %p256 = pneg %p255
      // Predicated region
      $region9: #{tpu_custom_call.1} parent=5 // pred_check
        _
      $region10: #{tpu_custom_call.1} parent=5 // pred_check_branch
        %258 = sbr.rel (%p255) target = $region12
      $region11: #{tpu_custom_call.1} parent=5 // pred_region
        %s259 = ssub.s32 %s23, 1
        // Predicated region
        $region13: #{tpu_custom_call.1} parent=11 // pred_check
          %p260 = pneg %p61
        $region14: #{tpu_custom_call.1} parent=11 // pred_check_branch
          %262 = sbr.rel (%p260) target = $region16
        $region15: #{tpu_custom_call.1} parent=11 // pred_region
          %s264 = ssub.s32 128, 128
          %265 = vsyncadd [#allocation3], %s264
          %s266 = smul.addr %s33, 128
          %s267 = scalar_lea.hbm %s0, %s266
          %s269 = sshll.u32 [#allocation2], 4
          %s270 = int_to_ptr.vmem [resolvable:$true] %s269
          %272 = dma.hbm_to_vmem [thread:$0]  %s267, 128, %s270, [#allocation3]
        $region16: #{tpu_custom_call.1} parent=11 // pred_fallthru
          _
      $region12: #{tpu_custom_call.1} parent=5 // pred_fallthru
        _
      %p273 = scmp.lt.s32.totalorder %s23, 5
      // Predicated region
      $region17: #{tpu_custom_call.1} parent=5 // pred_check
        %p274 = pneg %p273
      $region18: #{tpu_custom_call.1} parent=5 // pred_check_branch
        %276 = sbr.rel (%p274) target = $region20
      $region19: #{tpu_custom_call.1} parent=5 // pred_region
        // Predicated region
        $region21: #{tpu_custom_call.1} parent=19 // pred_check
          %p277 = pneg %p81
        $region22: #{tpu_custom_call.1} parent=19 // pred_check_branch
          %279 = sbr.rel (%p277) target = $region24
        $region23: #{tpu_custom_call.1} parent=19 // pred_region
          %s280 = sand.u32 %s23, 1
          %s281 = scalar_lea.sflag [#allocation6], %s280
          %s282 = sand.u32 %s71, 1
          %s283 = smul.addr %s282, 24
          %s284 = scalar_lea.vmem [#allocation5], %s283
          %s286 = ssub.s32 384, 384
          %287 = vsyncadd %s281, %s286
          %s288 = smul.addr %s30, 3
          %s289 = smul.addr %s288, 128
          %s290 = scalar_lea.hbm %s1, %s289
          %s291 = sshll.u32 %s284, 4
          %s292 = int_to_ptr.vmem [resolvable:$true] %s291
          %297 = dma.hbm_to_vmem [thread:$0]  %s290, 384, %s292, %s281, 128, 128, 8
        $region24: #{tpu_custom_call.1} parent=19 // pred_fallthru
          _
        // Predicated region
        $region25: #{tpu_custom_call.1} parent=19 // pred_check
          %p298 = pneg %p107
        $region26: #{tpu_custom_call.1} parent=19 // pred_check_branch
          %300 = sbr.rel (%p298) target = $region28
        $region27: #{tpu_custom_call.1} parent=19 // pred_region
          %s301 = sand.u32 %s23, 1
          %s302 = scalar_lea.sflag [#allocation6], %s301
          %s303 = sand.u32 %s97, 1
          %s304 = scalar_lea.vmem [#allocation7], %s303
          %s306 = ssub.s32 16, 16
          %307 = vsyncadd %s302, %s306
          %s308 = smul.addr %s30, 16
          %s309 = scalar_lea.hbm %s2, %s308
          %s311 = sshll.u32 %s304, 4
          %s312 = int_to_ptr.vmem [resolvable:$true] %s311
          %314 = dma.hbm_to_vmem [thread:$0]  %s309, 16, %s312, %s302
        $region28: #{tpu_custom_call.1} parent=19 // pred_fallthru
          _
        // Predicated region
        $region29: #{tpu_custom_call.1} parent=19 // pred_check
          %p315 = pneg %p133
        $region30: #{tpu_custom_call.1} parent=19 // pred_check_branch
          %317 = sbr.rel (%p315) target = $region32
        $region31: #{tpu_custom_call.1} parent=19 // pred_region
          %s318 = sand.u32 %s23, 1
          %s319 = scalar_lea.sflag [#allocation9], %s318
          %s320 = sand.u32 %s123, 1
          %s321 = smul.addr %s320, 32
          %s322 = scalar_lea.vmem [#allocation8], %s321
          %s324 = ssub.s32 512, 512
          %325 = vsyncadd %s319, %s324
          %s326 = smul.addr %s30, 4
          %s327 = smul.addr %s326, 128
          %s328 = scalar_lea.hbm %s3, %s327
          %s329 = sshll.u32 %s322, 4
          %s330 = int_to_ptr.vmem [resolvable:$true] %s329
          %335 = dma.hbm_to_vmem [thread:$0]  %s328, 512, %s330, %s319, 128, 128, 8
        $region32: #{tpu_custom_call.1} parent=19 // pred_fallthru
          _
        // Predicated region
        $region33: #{tpu_custom_call.1} parent=19 // pred_check
          %p336 = pneg %p159
        $region34: #{tpu_custom_call.1} parent=19 // pred_check_branch
          %338 = sbr.rel (%p336) target = $region36
        $region35: #{tpu_custom_call.1} parent=19 // pred_region
          %p339 = scmp.lt.s32.totalorder %s30, 4
          %s340 = scalar_select %p339, %s30, 4
          %s341 = scalar_lea.vmem %s4, %s340
        $region36: #{tpu_custom_call.1} parent=19 // pred_fallthru
          _
        // Predicated region
        $region37: #{tpu_custom_call.1} parent=19 // pred_check
          %p342 = pneg %p185
        $region38: #{tpu_custom_call.1} parent=19 // pred_check_branch
          %344 = sbr.rel (%p342) target = $region40
        $region39: #{tpu_custom_call.1} parent=19 // pred_region
          %s345 = sand.u32 %s23, 1
          %s346 = scalar_lea.sflag [#allocation9], %s345
          %s347 = sand.u32 %s175, 1
          %s348 = smul.addr %s347, 32
          %s349 = scalar_lea.vmem [#allocation10], %s348
          %s351 = ssub.s32 512, 512
          %352 = vsyncadd %s346, %s351
          %s353 = smul.addr %s30, 4
          %s354 = smul.addr %s353, 128
          %s355 = scalar_lea.hbm %s5, %s354
          %s356 = sshll.u32 %s349, 4
          %s357 = int_to_ptr.vmem [resolvable:$true] %s356
          %362 = dma.hbm_to_vmem [thread:$0]  %s355, 512, %s357, %s346, 128, 128, 8
        $region40: #{tpu_custom_call.1} parent=19 // pred_fallthru
          _
        // Predicated region
        $region41: #{tpu_custom_call.1} parent=19 // pred_check
          %p363 = pneg %p211
        $region42: #{tpu_custom_call.1} parent=19 // pred_check_branch
          %365 = sbr.rel (%p363) target = $region44
        $region43: #{tpu_custom_call.1} parent=19 // pred_region
          %p366 = scmp.lt.s32.totalorder %s30, 4
          %s367 = scalar_select %p366, %s30, 4
          %s368 = scalar_lea.vmem %s6, %s367
        $region44: #{tpu_custom_call.1} parent=19 // pred_fallthru
          _
      $region20: #{tpu_custom_call.1} parent=5 // pred_fallthru
        _
      %p369 = scmp.le.s32.totalorder 1, %s23
      %p370 = scmp.lt.s32.totalorder %s23, 6
      %p371 = pnand %p369, %p370
      %p372 = pneg %p371
      // Predicated region
      $region45: #{tpu_custom_call.1} parent=5 // pred_check
        _
      $region46: #{tpu_custom_call.1} parent=5 // pred_check_branch
        %374 = sbr.rel (%p371) target = $region48
      $region47: #{tpu_custom_call.1} parent=5 // pred_region
        %s375 = ssub.s32 %s23, 1
        // Predicated region
        $region49: #{tpu_custom_call.1} parent=47 // pred_check
          %p376 = pneg %p61
        $region50: #{tpu_custom_call.1} parent=47 // pred_check_branch
          %378 = sbr.rel (%p376) target = $region52
        $region51: #{tpu_custom_call.1} parent=47 // pred_region
          %379 = dma.done [#allocation3], 128
        $region52: #{tpu_custom_call.1} parent=47 // pred_fallthru
          _
        %s380 = sand.u32 %s28, 1
        %s381 = scalar_lea.sflag [#allocation6], %s380
        %s382 = sand.u32 %s74, 1
        %s383 = smul.addr %s382, 24
        %s384 = scalar_lea.vmem [#allocation5], %s383
        // Predicated region
        $region53: #{tpu_custom_call.1} parent=47 // pred_check
          %p385 = pneg %p87
        $region54: #{tpu_custom_call.1} parent=47 // pred_check_branch
          %387 = sbr.rel (%p385) target = $region56
        $region55: #{tpu_custom_call.1} parent=47 // pred_region
          %388 = dma.done %s381, 384
        $region56: #{tpu_custom_call.1} parent=47 // pred_fallthru
          _
        %s389 = sand.u32 %s28, 1
        %s390 = scalar_lea.sflag [#allocation6], %s389
        %s391 = sand.u32 %s100, 1
        %s392 = scalar_lea.vmem [#allocation7], %s391
        // Predicated region
        $region57: #{tpu_custom_call.1} parent=47 // pred_check
          %p393 = pneg %p113
        $region58: #{tpu_custom_call.1} parent=47 // pred_check_branch
          %395 = sbr.rel (%p393) target = $region60
        $region59: #{tpu_custom_call.1} parent=47 // pred_region
          %396 = dma.done %s390, 16
        $region60: #{tpu_custom_call.1} parent=47 // pred_fallthru
          _
        %s397 = sand.u32 %s28, 1
        %s398 = scalar_lea.sflag [#allocation9], %s397
        %s399 = sand.u32 %s126, 1
        %s400 = smul.addr %s399, 32
        %s401 = scalar_lea.vmem [#allocation8], %s400
        // Predicated region
        $region61: #{tpu_custom_call.1} parent=47 // pred_check
          %p402 = pneg %p139
        $region62: #{tpu_custom_call.1} parent=47 // pred_check_branch
          %404 = sbr.rel (%p402) target = $region64
        $region63: #{tpu_custom_call.1} parent=47 // pred_region
          %405 = dma.done %s398, 512
        $region64: #{tpu_custom_call.1} parent=47 // pred_fallthru
          _
        %s406 = sand.u32 %s28, 1
        %s407 = scalar_lea.sflag [#allocation9], %s406
        %s408 = sand.u32 %s178, 1
        %s409 = smul.addr %s408, 32
        %s410 = scalar_lea.vmem [#allocation10], %s409
        // Predicated region
        $region65: #{tpu_custom_call.1} parent=47 // pred_check
          %p411 = pneg %p191
        $region66: #{tpu_custom_call.1} parent=47 // pred_check_branch
          %413 = sbr.rel (%p411) target = $region68
        $region67: #{tpu_custom_call.1} parent=47 // pred_region
          %414 = dma.done %s407, 512
        $region68: #{tpu_custom_call.1} parent=47 // pred_fallthru
          _
        %p415 = pneg %p61
        %p416 = pneg %p58
        %s417 = sand.u32 %s28, 1
        %s418 = scalar_lea.sflag [#allocation6], %s417
        %s419 = sand.u32 %s74, 1
        %s420 = smul.addr %s419, 24
        %s421 = scalar_lea.vmem [#allocation5], %s420
        %p422 = pneg %p87
        %p423 = pneg %p84
        %s424 = sand.u32 %s28, 1
        %s425 = scalar_lea.sflag [#allocation6], %s424
        %s426 = sand.u32 %s100, 1
        %s427 = scalar_lea.vmem [#allocation7], %s426
        %p428 = pneg %p113
        %p429 = pneg %p110
        %s430 = sand.u32 %s28, 1
        %s431 = scalar_lea.sflag [#allocation9], %s430
        %s432 = sand.u32 %s126, 1
        %s433 = smul.addr %s432, 32
        %s434 = scalar_lea.vmem [#allocation8], %s433
        %p435 = pneg %p139
        %p436 = pneg %p136
        %p437 = scmp.lt.s32.totalorder %s32, 4
        %s438 = scalar_select %p437, %s32, 4
        %s439 = scalar_lea.vmem %s4, %s438
        %p440 = pneg %p165
        %p441 = pneg %p162
        %s442 = sand.u32 %s28, 1
        %s443 = scalar_lea.sflag [#allocation9], %s442
        %s444 = sand.u32 %s178, 1
        %s445 = smul.addr %s444, 32
        %s446 = scalar_lea.vmem [#allocation10], %s445
        %p447 = pneg %p191
        %p448 = pneg %p188
        %p449 = scmp.lt.s32.totalorder %s32, 4
        %s450 = scalar_select %p449, %s32, 4
        %s451 = scalar_lea.vmem %s6, %s450
        %p452 = pneg %p217
        %p453 = pneg %p214
        %p454 = pneg %p245
        %p455 = pneg %p242
        %s456 = sand.u32 %s232, 1
        %s457 = scalar_lea.sflag [#allocation4], %s456
        %s458 = sand.u32 %s232, 1
        %s459 = smul.addr %s458, 8
        %s460 = scalar_lea.vmem [#allocation11], %s459
        %p461 = scmp.lt.s32.totalorder %s32, 4
        %s462 = scalar_select %p461, %s32, 4
        %s463 = scalar_lea.vmem %s4, %s462
        %p464 = scmp.lt.s32.totalorder %s32, 4
        %s465 = scalar_select %p464, %s32, 4
        %s466 = scalar_lea.vmem %s6, %s465
        %v467 = vld [vmem:[#allocation2] sm:$0xff]
        %v468 = vld [vmem:[%s384] sm:$0xff]
        %v469 = vld [vmem:[%s384 + $0x8] sm:$0xff]
        %v470 = vld [vmem:[%s384 + $0x10] sm:$0xff]
        %v471 = vld [vmem:[%s392] sm:$0x1]
        %v473 = vlaneseq
        %v474 = vshrl.u32 %v473, 7
        %v475 = vsub.s32 0, %v474
        %v476 = vrot.slane %v471, %v475
        %vm478 = vcmask 195584
        %v480 = vsel %vm478, %v467, 0
        %482 = vmatprep.subr.mxu0 0.0
        %483 = vmatpush1.msra.mxu0 0.0
        %484 = vmatprep.subr.mxu0 0.0
        %485 = vmatpush1.msra.mxu0 0.0
        %486 = vmatprep.subr.mxu0 0.0
        %487 = vmatpush1.msra.mxu0 0.0
        %488 = vmatprep.subr.mxu0 0.0
        %489 = vmatpush1.msra.mxu0 0.0
        %490 = vmatprep.subr.mxu0 0.0
        %491 = vmatpush1.msra.mxu0 0.0
        %492 = vmatprep.subr.mxu0 0.0
        %493 = vmatpush1.msra.mxu0 0.0
        %494 = vmatprep.subr.mxu0 0.0
        %495 = vmatpush1.msra.mxu0 0.0
        %496 = vmatprep.subr.mxu0 0.0
        %497 = vmatpush1.msra.mxu0 0.0
        %498 = vmatprep.subr.mxu0 0.0
        %499 = vmatpush1.msra.mxu0 0.0
        %500 = vmatprep.subr.mxu0 0.0
        %501 = vmatpush1.msra.mxu0 0.0
        %502 = vmatprep.subr.mxu0 0.0
        %503 = vmatpush1.msra.mxu0 0.0
        %504 = vmatprep.subr.mxu0 0.0
        %505 = vmatpush1.msra.mxu0 0.0
        %506 = vmatprep.subr.mxu0 0.0
        %507 = vmatpush1.msra.mxu0 0.0
        %508 = vmatprep.subr.mxu0 0.0
        %509 = vmatpush1.msra.mxu0 %v470
        %510 = vmatprep.subr.mxu0 0.0
        %511 = vmatpush1.msra.mxu0 %v469
        %512 = vmatprep.subr.mxu0 0.0
        %513 = vmatpush1.msra.mxu0 %v468
        %514 = vmatprep.subr.mxu0 0.0
        %515 = vmatpush2.msra.mxu0 0.0
        %516 = vmatprep.subr.mxu0 0.0
        %517 = vmatpush2.msra.mxu0 0.0
        %518 = vmatprep.subr.mxu0 0.0
        %519 = vmatpush2.msra.mxu0 0.0
        %520 = vmatprep.subr.mxu0 0.0
        %521 = vmatpush2.msra.mxu0 0.0
        %522 = vmatprep.subr.mxu0 0.0
        %523 = vmatpush2.msra.mxu0 0.0
        %524 = vmatprep.subr.mxu0 0.0
        %525 = vmatpush2.msra.mxu0 0.0
        %526 = vmatprep.subr.mxu0 0.0
        %527 = vmatpush2.msra.mxu0 0.0
        %528 = vmatprep.subr.mxu0 0.0
        %529 = vmatpush2.msra.mxu0 0.0
        %530 = vmatprep.subr.mxu0 0.0
        %531 = vmatpush2.msra.mxu0 0.0
        %532 = vmatprep.subr.mxu0 0.0
        %533 = vmatpush2.msra.mxu0 0.0
        %534 = vmatprep.subr.mxu0 0.0
        %535 = vmatpush2.msra.mxu0 0.0
        %536 = vmatprep.subr.mxu0 0.0
        %537 = vmatpush2.msra.mxu0 0.0
        %538 = vmatprep.subr.mxu0 0.0
        %539 = vmatpush2.msra.mxu0 0.0
        %540 = vmatprep.subr.mxu0 0.0
        %541 = vmatpush2.msra.mxu0 0.0
        %542 = vmatprep.subr.mxu0 0.0
        %543 = vmatpush2.msra.mxu0 0.0
        %544 = vmatprep.subr.mxu0 0.0
        %545 = vmatpush2.msra.mxu0 0.0
        %546 = vmatprep.mubr.f32.mxu0 0.0
        %547 = vmatmul.mubr.f32.gmra.mxu0 %v480
        %v548 = vpop.f32.mrf.mxu0
        %v549 = vadd.f32 %v476, %v548
        %v550 = vpop.f32.mrf.mxu0
        %551 = vdwg.mxu0
        %vm552 = vcmp.gt.f32.partialorder %v549, 0.0
        %v553 = vmul.f32 %v549, 0.01
        %v554 = vsel %vm552, %v549, %v553
        %v555 = vld [vmem:[%s401] sm:$0xff]
        %v556 = vld [vmem:[%s401 + $0x8] sm:$0xff]
        %v557 = vld [vmem:[%s401 + $0x10] sm:$0xff]
        %v558 = vld [vmem:[%s401 + $0x18] sm:$0xff]
        %v559 = vld [vmem:[%s463] sm:$0x1]
        %v561 = vlaneseq
        %v562 = vshrl.u32 %v561, 7
        %v563 = vsub.s32 0, %v562
        %v564 = vrot.slane %v559, %v563
        %vm566 = vcmask 261120
        %v568 = vsel %vm566, %v554, 0
        %570 = vmatprep.subr.mxu0 0.0
        %571 = vmatpush1.msra.mxu0 0.0
        %572 = vmatprep.subr.mxu0 0.0
        %573 = vmatpush1.msra.mxu0 0.0
        %574 = vmatprep.subr.mxu0 0.0
        %575 = vmatpush1.msra.mxu0 0.0
        %576 = vmatprep.subr.mxu0 0.0
        %577 = vmatpush1.msra.mxu0 0.0
        %578 = vmatprep.subr.mxu0 0.0
        %579 = vmatpush1.msra.mxu0 0.0
        %580 = vmatprep.subr.mxu0 0.0
        %581 = vmatpush1.msra.mxu0 0.0
        %582 = vmatprep.subr.mxu0 0.0
        %583 = vmatpush1.msra.mxu0 0.0
        %584 = vmatprep.subr.mxu0 0.0
        %585 = vmatpush1.msra.mxu0 0.0
        %586 = vmatprep.subr.mxu0 0.0
        %587 = vmatpush1.msra.mxu0 0.0
        %588 = vmatprep.subr.mxu0 0.0
        %589 = vmatpush1.msra.mxu0 0.0
        %590 = vmatprep.subr.mxu0 0.0
        %591 = vmatpush1.msra.mxu0 0.0
        %592 = vmatprep.subr.mxu0 0.0
        %593 = vmatpush1.msra.mxu0 0.0
        %594 = vmatprep.subr.mxu0 0.0
        %595 = vmatpush1.msra.mxu0 %v558
        %596 = vmatprep.subr.mxu0 0.0
        %597 = vmatpush1.msra.mxu0 %v557
        %598 = vmatprep.subr.mxu0 0.0
        %599 = vmatpush1.msra.mxu0 %v556
        %600 = vmatprep.subr.mxu0 0.0
        %601 = vmatpush1.msra.mxu0 %v555
        %602 = vmatprep.subr.mxu0 0.0
        %603 = vmatpush2.msra.mxu0 0.0
        %604 = vmatprep.subr.mxu0 0.0
        %605 = vmatpush2.msra.mxu0 0.0
        %606 = vmatprep.subr.mxu0 0.0
        %607 = vmatpush2.msra.mxu0 0.0
        %608 = vmatprep.subr.mxu0 0.0
        %609 = vmatpush2.msra.mxu0 0.0
        %610 = vmatprep.subr.mxu0 0.0
        %611 = vmatpush2.msra.mxu0 0.0
        %612 = vmatprep.subr.mxu0 0.0
        %613 = vmatpush2.msra.mxu0 0.0
        %614 = vmatprep.subr.mxu0 0.0
        %615 = vmatpush2.msra.mxu0 0.0
        %616 = vmatprep.subr.mxu0 0.0
        %617 = vmatpush2.msra.mxu0 0.0
        %618 = vmatprep.subr.mxu0 0.0
        %619 = vmatpush2.msra.mxu0 0.0
        %620 = vmatprep.subr.mxu0 0.0
        %621 = vmatpush2.msra.mxu0 0.0
        %622 = vmatprep.subr.mxu0 0.0
        %623 = vmatpush2.msra.mxu0 0.0
        %624 = vmatprep.subr.mxu0 0.0
        %625 = vmatpush2.msra.mxu0 0.0
        %626 = vmatprep.subr.mxu0 0.0
        %627 = vmatpush2.msra.mxu0 0.0
        %628 = vmatprep.subr.mxu0 0.0
        %629 = vmatpush2.msra.mxu0 0.0
        %630 = vmatprep.subr.mxu0 0.0
        %631 = vmatpush2.msra.mxu0 0.0
        %632 = vmatprep.subr.mxu0 0.0
        %633 = vmatpush2.msra.mxu0 0.0
        %634 = vmatprep.mubr.f32.mxu0 0.0
        %635 = vmatmul.mubr.f32.gmra.mxu0 %v568
        %v636 = vpop.f32.mrf.mxu0
        %v637 = vadd.f32 %v564, %v636
        %v638 = vpop.f32.mrf.mxu0
        %639 = vdwg.mxu0
        %vm640 = vcmp.gt.f32.partialorder %v637, 0.0
        %v641 = vmul.f32 %v637, 0.01
        %v642 = vsel %vm640, %v637, %v641
        %v643 = vld [vmem:[%s410] sm:$0xff]
        %v644 = vld [vmem:[%s410 + $0x8] sm:$0xff]
        %v645 = vld [vmem:[%s410 + $0x10] sm:$0xff]
        %v646 = vld [vmem:[%s410 + $0x18] sm:$0xff]
        %v647 = vld [vmem:[%s466] sm:$0x1]
        %v649 = vlaneseq
        %v650 = vshrl.u32 %v649, 7
        %v651 = vsub.s32 0, %v650
        %v652 = vrot.slane %v647, %v651
        %v655 = vsel %vm566, %v642, 0
        %657 = vmatprep.subr.mxu0 0.0
        %658 = vmatpush1.msra.mxu0 0.0
        %659 = vmatprep.subr.mxu0 0.0
        %660 = vmatpush1.msra.mxu0 0.0
        %661 = vmatprep.subr.mxu0 0.0
        %662 = vmatpush1.msra.mxu0 0.0
        %663 = vmatprep.subr.mxu0 0.0
        %664 = vmatpush1.msra.mxu0 0.0
        %665 = vmatprep.subr.mxu0 0.0
        %666 = vmatpush1.msra.mxu0 0.0
        %667 = vmatprep.subr.mxu0 0.0
        %668 = vmatpush1.msra.mxu0 0.0
        %669 = vmatprep.subr.mxu0 0.0
        %670 = vmatpush1.msra.mxu0 0.0
        %671 = vmatprep.subr.mxu0 0.0
        %672 = vmatpush1.msra.mxu0 0.0
        %673 = vmatprep.subr.mxu0 0.0
        %674 = vmatpush1.msra.mxu0 0.0
        %675 = vmatprep.subr.mxu0 0.0
        %676 = vmatpush1.msra.mxu0 0.0
        %677 = vmatprep.subr.mxu0 0.0
        %678 = vmatpush1.msra.mxu0 0.0
        %679 = vmatprep.subr.mxu0 0.0
        %680 = vmatpush1.msra.mxu0 0.0
        %681 = vmatprep.subr.mxu0 0.0
        %682 = vmatpush1.msra.mxu0 %v646
        %683 = vmatprep.subr.mxu0 0.0
        %684 = vmatpush1.msra.mxu0 %v645
        %685 = vmatprep.subr.mxu0 0.0
        %686 = vmatpush1.msra.mxu0 %v644
        %687 = vmatprep.subr.mxu0 0.0
        %688 = vmatpush1.msra.mxu0 %v643
        %689 = vmatprep.subr.mxu0 0.0
        %690 = vmatpush2.msra.mxu0 0.0
        %691 = vmatprep.subr.mxu0 0.0
        %692 = vmatpush2.msra.mxu0 0.0
        %693 = vmatprep.subr.mxu0 0.0
        %694 = vmatpush2.msra.mxu0 0.0
        %695 = vmatprep.subr.mxu0 0.0
        %696 = vmatpush2.msra.mxu0 0.0
        %697 = vmatprep.subr.mxu0 0.0
        %698 = vmatpush2.msra.mxu0 0.0
        %699 = vmatprep.subr.mxu0 0.0
        %700 = vmatpush2.msra.mxu0 0.0
        %701 = vmatprep.subr.mxu0 0.0
        %702 = vmatpush2.msra.mxu0 0.0
        %703 = vmatprep.subr.mxu0 0.0
        %704 = vmatpush2.msra.mxu0 0.0
        %705 = vmatprep.subr.mxu0 0.0
        %706 = vmatpush2.msra.mxu0 0.0
        %707 = vmatprep.subr.mxu0 0.0
        %708 = vmatpush2.msra.mxu0 0.0
        %709 = vmatprep.subr.mxu0 0.0
        %710 = vmatpush2.msra.mxu0 0.0
        %711 = vmatprep.subr.mxu0 0.0
        %712 = vmatpush2.msra.mxu0 0.0
        %713 = vmatprep.subr.mxu0 0.0
        %714 = vmatpush2.msra.mxu0 0.0
        %715 = vmatprep.subr.mxu0 0.0
        %716 = vmatpush2.msra.mxu0 0.0
        %717 = vmatprep.subr.mxu0 0.0
        %718 = vmatpush2.msra.mxu0 0.0
        %719 = vmatprep.subr.mxu0 0.0
        %720 = vmatpush2.msra.mxu0 0.0
        %721 = vmatprep.mubr.f32.mxu0 0.0
        %722 = vmatmul.mubr.f32.gmra.mxu0 %v655
        %v723 = vpop.f32.mrf.mxu0
        %v724 = vadd.f32 %v652, %v723
        %v725 = vpop.f32.mrf.mxu0
        %726 = vdwg.mxu0
        %vm727 = vcmp.gt.f32.partialorder %v724, 0.0
        %v728 = vmul.f32 %v724, 0.01
        %v729 = vsel %vm727, %v724, %v728
        %730 = vst [vmem:[%s460] sm:$0xff] %v729
        %s731 = sand.u32 %s232, 1
        %s732 = scalar_lea.sflag [#allocation4], %s731
        %s733 = sand.u32 %s232, 1
        %s734 = smul.addr %s733, 8
        %s735 = scalar_lea.vmem [#allocation11], %s734
        // Predicated region
        $region69: #{tpu_custom_call.1} parent=47 // pred_check
          %p736 = pneg %p242
        $region70: #{tpu_custom_call.1} parent=47 // pred_check_branch
          %738 = sbr.rel (%p736) target = $region72
        $region71: #{tpu_custom_call.1} parent=47 // pred_region
          %s740 = ssub.s32 128, 128
          %741 = vsyncadd %s732, %s740
          %s742 = sadd.s32 %s33, %s32
          %s743 = smul.addr %s742, 128
          %s744 = scalar_lea.hbm %s7, %s743
          %s746 = sshll.u32 %s735, 4
          %s747 = int_to_ptr.vmem [resolvable:$true] %s746
          %749 = dma.vmem_to_hbm [thread:$0]  %s747, 128, %s744, %s732
        $region72: #{tpu_custom_call.1} parent=47 // pred_fallthru
          _
      $region48: #{tpu_custom_call.1} parent=5 // pred_fallthru
        _
      %p750 = scmp.le.s32.totalorder 2, %s23
      // Predicated region
      $region73: #{tpu_custom_call.1} parent=5 // pred_check
        %p751 = pneg %p750
      $region74: #{tpu_custom_call.1} parent=5 // pred_check_branch
        %753 = sbr.rel (%p751) target = $region76
      $region75: #{tpu_custom_call.1} parent=5 // pred_region
        %s754 = ssub.s32 %s23, 2
        // Predicated region
        $region77: #{tpu_custom_call.1} parent=75 // pred_check
          %p755 = pneg %p248
        $region78: #{tpu_custom_call.1} parent=75 // pred_check_branch
          %757 = sbr.rel (%p755) target = $region80
        $region79: #{tpu_custom_call.1} parent=75 // pred_region
          %s758 = sand.u32 %s233, 1
          %s759 = scalar_lea.sflag [#allocation4], %s758
          %s760 = sand.u32 %s233, 1
          %s761 = smul.addr %s760, 8
          %s762 = scalar_lea.vmem [#allocation11], %s761
          %763 = dma.done %s759, 128
        $region80: #{tpu_custom_call.1} parent=75 // pred_fallthru
          _
      $region76: #{tpu_custom_call.1} parent=5 // pred_fallthru
        _
    $region6: #{tpu_custom_call.1} parent=1 // loop_footer
      %s27 = sadd.s32 1, %s23
    $region7: #{tpu_custom_call.1} parent=1 // loop_footer_branch
      %22 = sbr.rel target = $region3
    $region8: #{tpu_custom_call.1} parent=1 // loop_exit
      _
    %764 = vsyncpa [#allocation3], 1
    %s765 = scalar_lea.sflag [#allocation3], 1
    %766 = vsyncpa %s765, 1
    %767 = vsyncpa [#allocation6], 1
    %s768 = scalar_lea.sflag [#allocation6], 1
    %769 = vsyncpa %s768, 1
    %770 = vsyncpa [#allocation9], 1
    %s771 = scalar_lea.sflag [#allocation9], 1
    %772 = vsyncpa %s771, 1
    %773 = vsyncpa [#allocation4], 1
    %s774 = scalar_lea.sflag [#allocation4], 1
    %775 = vsyncpa %s774, 1

</llo_original>
